<compile_context>
chip_gen: v7x
topology: tpu7x:2x2x1
jax: 0.10.0
libtpu: 0.0.40
codegen_flags: <defaults>
</compile_context>

<pallas_src>
import functools

import jax
import jax.numpy as jnp
from jax import lax
from jax.experimental import pallas as pl
from jax.experimental.pallas import tpu as pltpu

EPS = 1e-5


def _round_up(v, m):
    return ((v + m - 1) // m) * m


def _band_weights(w_hwio, wl, dtype):
    """Fold the 3 dx taps + Cin into one banded GEMM operand per dy tap.

    B[k][(wo+dx)*Cin + ci, wo*Cout + co] = w[k, dx+1, ci, co]   (k = dy+1)
    Band truncation at wo=0 / wo=wl-1 implements SAME zero padding along W.
    Returns (3, wl*Cin, wl*Cout) in `dtype`.
    """
    mats = []
    for ky in range(3):
        m = 0.0
        for kx, dx in enumerate((-1, 0, 1)):
            eye = jnp.eye(wl, k=-dx, dtype=jnp.float32)
            m = m + jnp.kron(eye, w_hwio[ky, kx].astype(jnp.float32))
        mats.append(m)
    return jnp.stack(mats).astype(dtype)


# ------------------------- fused Pallas kernel -------------------------

def _resnet_block_kernel(x_ref, w1_ref, w2_ref, bn_ref, out_ref,
                         x_ext_ref, a1_ext_ref,
                         *, n_img, h, w, c, wl, hp, margin, rext):
    lc = wl * c                      # packed lane width (multiple of 128)
    rows = n_img * hp                # core rows: one per (image, padded row)
    f32 = jnp.float32
    inv_n = 1.0 / float(n_img * h * w)

    # ---- in-kernel SAME padding (no host-side jnp.pad round trip) ---------
    # Zeroing the whole x staging buffer *is* the spatial padding + alignment
    # filler (7 vreg-rows); then each image's real rows are dropped in place.
    # Row offsets are 8-aligned by construction (margin + 1 == 8, hp % 8 == 0).
    x_ext_ref[...] = jnp.zeros_like(x_ext_ref)
    for n in range(n_img):                              # static, tiny N
        r0 = margin + n * hp + 1
        x_ext_ref[r0:r0 + h, 0:w * c] = x_ref[n * h:(n + 1) * h, :]

    # a1 staging buffer: only the margin rows need explicit zeroing; the
    # interior (incl. per-image padding rows, zeroed via rowmask) is fully
    # overwritten below.
    a1_ext_ref[0:margin, :] = jnp.zeros((margin, lc), f32)
    a1_ext_ref[margin + rows:rext, :] = jnp.zeros((rext - margin - rows, lc), f32)

    # ---- masks / selection matrices from iota (no extra HBM inputs) -------
    lane_i = lax.broadcasted_iota(jnp.int32, (lc, c), 0)
    ch_i = lax.broadcasted_iota(jnp.int32, (lc, c), 1)
    sel = ((lane_i % c == ch_i) & (lane_i < w * c)).astype(f32)      # (lc, c)
    ch_r = lax.broadcasted_iota(jnp.int32, (c, lc), 0)
    lane_r = lax.broadcasted_iota(jnp.int32, (c, lc), 1)
    selt = ((lane_r % c == ch_r) & (lane_r < w * c)).astype(f32)     # (c, lc)
    r_i = lax.broadcasted_iota(jnp.int32, (rows, 1), 0)
    hr = r_i % hp
    rowmask = ((hr >= 1) & (hr <= h)).astype(f32)                    # (rows, 1)

    def conv3x3(src_ref, band_ref):
        # One K = wl*C GEMM per dy tap (dx taps + Cin folded into K).
        acc = None
        for k in range(3):                                           # dy = k-1
            s = margin + (k - 1)
            a = src_ref[s:s + rows, :].astype(band_ref.dtype)
            p = jnp.dot(a, band_ref[k], preferred_element_type=f32)
            acc = p if acc is None else acc + p
        return acc                                                   # (rows, lc) f32

    def bn_relu(y, gamma, beta):
        # Masked training-mode batch statistics; the lane->channel reduction
        # and the per-channel affine broadcast both run on the MXU.
        ym = y * rowmask
        red = jnp.concatenate(
            [jnp.sum(ym, axis=0, keepdims=True),
             jnp.sum(ym * y, axis=0, keepdims=True)], axis=0)        # (2, lc)
        stats = jnp.dot(red, sel, preferred_element_type=f32)        # (2, c)
        mean = stats[0:1, :] * inv_n
        var = stats[1:2, :] * inv_n - mean * mean                    # biased var
        scale = gamma * lax.rsqrt(var + EPS)
        shift = beta - mean * scale
        aff = jnp.dot(jnp.concatenate([scale, shift], axis=0), selt,
                      preferred_element_type=f32)                    # (2, lc)
        # scale/shift are 0 on padding lanes -> relu(...) == 0 there.
        return jnp.maximum(y * aff[0:1, :] + aff[1:2, :], 0.0)

    # ---- conv1 -> bn1 (batch stats) -> relu, staged for conv2 -------------
    y1 = conv3x3(x_ext_ref, w1_ref)
    a1 = bn_relu(y1, bn_ref[0:1, :], bn_ref[1:2, :]) * rowmask
    a1_ext_ref[margin:margin + rows, :] = a1

    # ---- conv2 -> bn2 -> relu -> residual add -> relu ----------------------
    y2 = conv3x3(a1_ext_ref, w2_ref)
    a2 = bn_relu(y2, bn_ref[2:3, :], bn_ref[3:4, :])
    out_ref[...] = jnp.maximum(x_ext_ref[margin:margin + rows, :] + a2, 0.0)


# ------------------------- JAX wrapper -------------------------

def resnet_block(x, params, *, mxu_dtype=jnp.float32):
    """x: (N, H, W, C) float32 NHWC.  same_shape=True ResNet basic block."""
    w1, g1, b1, w2, g2, b2 = params
    n, h, w, c = x.shape
    cout = w1.shape[-1]
    assert c == cout, "same_shape=True requires in_channel == out_channel"
    assert 128 % c == 0 or (w * c) % 128 == 0, "need C compatible with 128 lanes"

    # lane packing: lanes = (padded W) * C rounded up to full 128-lane vregs
    wl = _round_up(max(w * c, 128), 128) // c
    lc = wl * c
    hp = _round_up(h + 2, 8)      # per-image rows: 1 top pad + H + pad/filler
    margin = 7                    # data rows start at margin + 1 == 8 (aligned)
    rows = n * hp
    rext = _round_up(margin + rows + 1, 8)

    band1 = _band_weights(w1, wl, mxu_dtype)          # (3, lc, lc)
    band2 = _band_weights(w2, wl, mxu_dtype)
    bn = jnp.stack([g1, b1, g2, b2]).astype(jnp.float32)   # (4, C)

    x2 = x.reshape(n * h, w * c)  # contiguous reshape only; padding in-kernel

    kernel = functools.partial(_resnet_block_kernel, n_img=n, h=h, w=w, c=c,
                               wl=wl, hp=hp, margin=margin, rext=rext)
    out = pl.pallas_call(
        kernel,
        out_shape=jax.ShapeDtypeStruct((rows, lc), jnp.float32),
        scratch_shapes=[pltpu.VMEM((rext, lc), jnp.float32),   # padded x
                        pltpu.VMEM((rext, lc), jnp.float32)],  # bn1/relu output
    )(x2, band1, band2, bn)

    # drop padding rows / lanes
    return out.reshape(n, hp, wl, c)[:, 1:h + 1, :w, :]


# ------------------------- pure-JAX reference -------------------------

def _ref_conv3x3(x, w):
    return lax.conv_general_dilated(
        x, w, window_strides=(1, 1), padding="SAME",
        dimension_numbers=("NHWC", "HWIO", "NHWC"))


def _ref_bn_relu(y, gamma, beta):
    mean = jnp.mean(y, axis=(0, 1, 2))
    var = jnp.mean((y - mean) ** 2, axis=(0, 1, 2))
    return jnp.maximum(gamma * (y - mean) / jnp.sqrt(var + EPS) + beta, 0.0)


def resnet_block_ref(x, params):
    w1, g1, b1, w2, g2, b2 = params
    out = _ref_bn_relu(_ref_conv3x3(x, w1), g1, b1)
    out = _ref_bn_relu(_ref_conv3x3(out, w2), g2, b2)
    return jnp.maximum(x + out, 0.0)


# ------------------------- main -------------------------

if __name__ == "__main__":
    N, C, H, W = 2, 4, 16, 16     # same_shape=True => in_channel == out_channel
    key = jax.random.PRNGKey(0)
    kx, k1, k2 = jax.random.split(key, 3)

    # Input (NCHW in PyTorch); generated directly in NHWC here.
    x = jax.random.normal(kx, (N, H, W, C), dtype=jnp.float32)

    # Deterministic parameters (conv weights ~ small normal; BN defaults).
    w1 = jax.random.normal(k1, (3, 3, C, C), dtype=jnp.float32) * 0.1
    w2 = jax.random.normal(k2, (3, 3, C, C), dtype=jnp.float32) * 0.1
    g1 = jnp.ones((C,), jnp.float32); b1 = jnp.zeros((C,), jnp.float32)
    g2 = jnp.ones((C,), jnp.float32); b2 = jnp.zeros((C,), jnp.float32)
    params = (w1, g1, b1, w2, g2, b2)

    ref = jax.block_until_ready(resnet_block_ref(x, params))

    # f32 MXU path: tight check of the fused structure / masks / batch stats.
    out_f32 = jax.block_until_ready(resnet_block(x, params, mxu_dtype=jnp.float32))
    assert out_f32.shape == (N, H, W, C)
    err32 = float(jnp.max(jnp.abs(out_f32 - ref)))
    assert jnp.allclose(out_f32, ref, atol=2e-3, rtol=2e-3), err32

    # bf16 MXU path (native MXU dtype; f32 accumulation and f32 BN/residual).
    # Looser bound: bf16 input rounding is amplified by the two BatchNorm
    # rescalings at these toy magnitudes.
    out_bf16 = jax.block_until_ready(resnet_block(x, params, mxu_dtype=jnp.bfloat16))
    assert out_bf16.shape == (N, H, W, C)
    err16 = float(jnp.max(jnp.abs(out_bf16 - ref)))
    assert jnp.allclose(out_bf16, ref, atol=1e-1, rtol=0.0), err16

    print("KERNEL_OK")
</pallas_src>

<mosaic_0001>
module attributes {stable_mosaic.version = 11 : i64} {
  func.func @_resnet_block_kernel(%arg0: memref<32x64xf32, #tpu.memory_space<vmem>>, %arg1: memref<3x128x128xf32, #tpu.memory_space<vmem>>, %arg2: memref<3x128x128xf32, #tpu.memory_space<vmem>>, %arg3: memref<4x4xf32, #tpu.memory_space<vmem>>, %arg4: memref<48x128xf32, #tpu.memory_space<vmem>>, %arg5: memref<56x128xf32, #tpu.memory_space<vmem>>, %arg6: memref<56x128xf32, #tpu.memory_space<vmem>>) attributes {dimension_semantics = [], scalar_prefetch = 0 : i64, scratch_operands = 2 : i64, tpu.core_type = #tpu.core_type<tc>} {
    %cst = arith.constant 0.000000e+00 : f32
    %0 = vector.broadcast %cst : f32 to vector<56x128xf32>
    %c0 = arith.constant 0 : index
    %c0_0 = arith.constant 0 : index
    %1 = vector.load %arg5[%c0, %c0_0] : memref<56x128xf32, #tpu.memory_space<vmem>>, vector<56x128xf32>
    tpu.vector_store %arg5[%c0, %c0_0], %0 {strides = array<i32>} : memref<56x128xf32, #tpu.memory_space<vmem>>, vector<56x128xf32>,
    %c0_1 = arith.constant 0 : index
    %c0_2 = arith.constant 0 : index
    %2 = vector.load %arg0[%c0_1, %c0_2] : memref<32x64xf32, #tpu.memory_space<vmem>>, vector<16x64xf32>
    %c8 = arith.constant 8 : index
    %c0_3 = arith.constant 0 : index
    %3 = vector.load %arg5[%c8, %c0_3] : memref<56x128xf32, #tpu.memory_space<vmem>>, vector<16x64xf32>
    tpu.vector_store %arg5[%c8, %c0_3], %2 {strides = array<i32>} : memref<56x128xf32, #tpu.memory_space<vmem>>, vector<16x64xf32>,
    %c16 = arith.constant 16 : index
    %c0_4 = arith.constant 0 : index
    %4 = vector.load %arg0[%c16, %c0_4] : memref<32x64xf32, #tpu.memory_space<vmem>>, vector<16x64xf32>
    %c32 = arith.constant 32 : index
    %c0_5 = arith.constant 0 : index
    %5 = vector.load %arg5[%c32, %c0_5] : memref<56x128xf32, #tpu.memory_space<vmem>>, vector<16x64xf32>
    tpu.vector_store %arg5[%c32, %c0_5], %4 {strides = array<i32>} : memref<56x128xf32, #tpu.memory_space<vmem>>, vector<16x64xf32>,
    %cst_6 = arith.constant 0.000000e+00 : f32
    %6 = vector.broadcast %cst_6 : f32 to vector<7x128xf32>
    %c0_7 = arith.constant 0 : index
    %c0_8 = arith.constant 0 : index
    %7 = vector.load %arg6[%c0_7, %c0_8] : memref<56x128xf32, #tpu.memory_space<vmem>>, vector<7x128xf32>
    tpu.vector_store %arg6[%c0_7, %c0_8], %6 {strides = array<i32>} : memref<56x128xf32, #tpu.memory_space<vmem>>, vector<7x128xf32>,
    %cst_9 = arith.constant 0.000000e+00 : f32
    %8 = vector.broadcast %cst_9 : f32 to vector<1x128xf32>
    %c55 = arith.constant 55 : index
    %c0_10 = arith.constant 0 : index
    %9 = vector.load %arg6[%c55, %c0_10] : memref<56x128xf32, #tpu.memory_space<vmem>>, vector<1x128xf32>
    tpu.vector_store %arg6[%c55, %c0_10], %8 {strides = array<i32>} : memref<56x128xf32, #tpu.memory_space<vmem>>, vector<1x128xf32>,
    %10 = tpu.iota {dimensions = array<i32: 0>} : vector<128x4xi32>
    %11 = tpu.iota {dimensions = array<i32: 1>} : vector<128x4xi32>
    %c4_i32 = arith.constant 4 : i32
    %c0_i32 = arith.constant 0 : i32
    %12 = arith.cmpi eq, %c4_i32, %c0_i32 : i32
    %c1_i32 = arith.constant 1 : i32
    %13 = arith.select %12, %c1_i32, %c4_i32 : i32
    %14 = vector.broadcast %13 : i32 to vector<128x4xi32>
    %15 = arith.remsi %10, %14 : vector<128x4xi32>
    %c0_i32_11 = arith.constant 0 : i32
    %16 = vector.broadcast %c0_i32_11 : i32 to vector<128x4xi32>
    %17 = arith.cmpi ne, %15, %16 : vector<128x4xi32>
    %c0_i32_12 = arith.constant 0 : i32
    %18 = vector.broadcast %c0_i32_12 : i32 to vector<128x4xi32>
    %19 = arith.cmpi slt, %15, %18 : vector<128x4xi32>
    %c0_i32_13 = arith.constant 0 : i32
    %20 = arith.cmpi slt, %13, %c0_i32_13 : i32
    %21 = vector.broadcast %20 : i1 to vector<128x4xi1>
    %22 = vector.broadcast %21 : vector<128x4xi1> to vector<128x4xi1>
    %23 = arith.xori %19, %22 : vector<128x4xi1>
    %24 = arith.andi %23, %17 : vector<128x4xi1>
    %25 = vector.broadcast %13 : i32 to vector<128x4xi32>
    %26 = arith.addi %15, %25 : vector<128x4xi32>
    %27 = arith.select %24, %26, %15 : vector<128x4xi1>, vector<128x4xi32>
    %28 = arith.cmpi eq, %27, %11 : vector<128x4xi32>
    %c64_i32 = arith.constant 64 : i32
    %29 = vector.broadcast %c64_i32 : i32 to vector<128x4xi32>
    %30 = arith.cmpi slt, %10, %29 : vector<128x4xi32>
    %31 = arith.andi %28, %30 : vector<128x4xi1>
    %32 = arith.extui %31 : vector<128x4xi1> to vector<128x4xi32>
    %33 = arith.sitofp %32 : vector<128x4xi32> to vector<128x4xf32>
    %34 = tpu.iota {dimensions = array<i32: 0>} : vector<4x128xi32>
    %35 = tpu.iota {dimensions = array<i32: 1>} : vector<4x128xi32>
    %c4_i32_14 = arith.constant 4 : i32
    %c0_i32_15 = arith.constant 0 : i32
    %36 = arith.cmpi eq, %c4_i32_14, %c0_i32_15 : i32
    %c1_i32_16 = arith.constant 1 : i32
    %37 = arith.select %36, %c1_i32_16, %c4_i32_14 : i32
    %38 = vector.broadcast %37 : i32 to vector<4x128xi32>
    %39 = arith.remsi %35, %38 : vector<4x128xi32>
    %c0_i32_17 = arith.constant 0 : i32
    %40 = vector.broadcast %c0_i32_17 : i32 to vector<4x128xi32>
    %41 = arith.cmpi ne, %39, %40 : vector<4x128xi32>
    %c0_i32_18 = arith.constant 0 : i32
    %42 = vector.broadcast %c0_i32_18 : i32 to vector<4x128xi32>
    %43 = arith.cmpi slt, %39, %42 : vector<4x128xi32>
    %c0_i32_19 = arith.constant 0 : i32
    %44 = arith.cmpi slt, %37, %c0_i32_19 : i32
    %45 = vector.broadcast %44 : i1 to vector<4x128xi1>
    %46 = vector.broadcast %45 : vector<4x128xi1> to vector<4x128xi1>
    %47 = arith.xori %43, %46 : vector<4x128xi1>
    %48 = arith.andi %47, %41 : vector<4x128xi1>
    %49 = vector.broadcast %37 : i32 to vector<4x128xi32>
    %50 = arith.addi %39, %49 : vector<4x128xi32>
    %51 = arith.select %48, %50, %39 : vector<4x128xi1>, vector<4x128xi32>
    %52 = arith.cmpi eq, %51, %34 : vector<4x128xi32>
    %c64_i32_20 = arith.constant 64 : i32
    %53 = vector.broadcast %c64_i32_20 : i32 to vector<4x128xi32>
    %54 = arith.cmpi slt, %35, %53 : vector<4x128xi32>
    %55 = arith.andi %52, %54 : vector<4x128xi1>
    %56 = arith.extui %55 : vector<4x128xi1> to vector<4x128xi32>
    %57 = arith.sitofp %56 : vector<4x128xi32> to vector<4x128xf32>
    %58 = tpu.iota {dimensions = array<i32: 0>} : vector<48x1xi32>
    %c24_i32 = arith.constant 24 : i32
    %c0_i32_21 = arith.constant 0 : i32
    %59 = arith.cmpi eq, %c24_i32, %c0_i32_21 : i32
    %c1_i32_22 = arith.constant 1 : i32
    %60 = arith.select %59, %c1_i32_22, %c24_i32 : i32
    %61 = vector.broadcast %60 : i32 to vector<48x1xi32>
    %62 = arith.remsi %58, %61 : vector<48x1xi32>
    %c0_i32_23 = arith.constant 0 : i32
    %63 = vector.broadcast %c0_i32_23 : i32 to vector<48x1xi32>
    %64 = arith.cmpi ne, %62, %63 : vector<48x1xi32>
    %c0_i32_24 = arith.constant 0 : i32
    %65 = vector.broadcast %c0_i32_24 : i32 to vector<48x1xi32>
    %66 = arith.cmpi slt, %62, %65 : vector<48x1xi32>
    %c0_i32_25 = arith.constant 0 : i32
    %67 = arith.cmpi slt, %60, %c0_i32_25 : i32
    %68 = vector.broadcast %67 : i1 to vector<48x1xi1>
    %69 = vector.broadcast %68 : vector<48x1xi1> to vector<48x1xi1>
    %70 = arith.xori %66, %69 : vector<48x1xi1>
    %71 = arith.andi %70, %64 : vector<48x1xi1>
    %72 = vector.broadcast %60 : i32 to vector<48x1xi32>
    %73 = arith.addi %62, %72 : vector<48x1xi32>
    %74 = arith.select %71, %73, %62 : vector<48x1xi1>, vector<48x1xi32>
    %c1_i32_26 = arith.constant 1 : i32
    %75 = vector.broadcast %c1_i32_26 : i32 to vector<48x1xi32>
    %76 = arith.cmpi sge, %74, %75 : vector<48x1xi32>
    %c16_i32 = arith.constant 16 : i32
    %77 = vector.broadcast %c16_i32 : i32 to vector<48x1xi32>
    %78 = arith.cmpi sle, %74, %77 : vector<48x1xi32>
    %79 = arith.andi %76, %78 : vector<48x1xi1>
    %80 = arith.extui %79 : vector<48x1xi1> to vector<48x1xi32>
    %81 = arith.sitofp %80 : vector<48x1xi32> to vector<48x1xf32>
    %c6 = arith.constant 6 : index
    %c0_27 = arith.constant 0 : index
    %82 = vector.load %arg5[%c6, %c0_27] : memref<56x128xf32, #tpu.memory_space<vmem>>, vector<48x128xf32>
    %c0_28 = arith.constant 0 : index
    %c0_29 = arith.constant 0 : index
    %c0_30 = arith.constant 0 : index
    %83 = vector.load %arg1[%c0_28, %c0_29, %c0_30] : memref<3x128x128xf32, #tpu.memory_space<vmem>>, vector<1x128x128xf32>
    %84 = vector.shape_cast %83 : vector<1x128x128xf32> to vector<128x128xf32>
    %cst_31 = arith.constant dense<0.000000e+00> : vector<48x128xf32>
    %85 = tpu.matmul %82, %84, %cst_31 {dimension_numbers = #tpu.dot_dimension_numbers<[1], [0], [0], [1], [0, 0, 1, 1], [], []>} : vector<48x128xf32>, vector<128x128xf32>, vector<48x128xf32> -> vector<48x128xf32>
    %c7 = arith.constant 7 : index
    %c0_32 = arith.constant 0 : index
    %86 = vector.load %arg5[%c7, %c0_32] : memref<56x128xf32, #tpu.memory_space<vmem>>, vector<48x128xf32>
    %c1 = arith.constant 1 : index
    %c0_33 = arith.constant 0 : index
    %c0_34 = arith.constant 0 : index
    %87 = vector.load %arg1[%c1, %c0_33, %c0_34] : memref<3x128x128xf32, #tpu.memory_space<vmem>>, vector<1x128x128xf32>
    %88 = vector.shape_cast %87 : vector<1x128x128xf32> to vector<128x128xf32>
    %cst_35 = arith.constant dense<0.000000e+00> : vector<48x128xf32>
    %89 = tpu.matmul %86, %88, %cst_35 {dimension_numbers = #tpu.dot_dimension_numbers<[1], [0], [0], [1], [0, 0, 1, 1], [], []>} : vector<48x128xf32>, vector<128x128xf32>, vector<48x128xf32> -> vector<48x128xf32>
    %90 = arith.addf %85, %89 : vector<48x128xf32>
    %c8_36 = arith.constant 8 : index
    %c0_37 = arith.constant 0 : index
    %91 = vector.load %arg5[%c8_36, %c0_37] : memref<56x128xf32, #tpu.memory_space<vmem>>, vector<48x128xf32>
    %c2 = arith.constant 2 : index
    %c0_38 = arith.constant 0 : index
    %c0_39 = arith.constant 0 : index
    %92 = vector.load %arg1[%c2, %c0_38, %c0_39] : memref<3x128x128xf32, #tpu.memory_space<vmem>>, vector<1x128x128xf32>
    %93 = vector.shape_cast %92 : vector<1x128x128xf32> to vector<128x128xf32>
    %cst_40 = arith.constant dense<0.000000e+00> : vector<48x128xf32>
    %94 = tpu.matmul %91, %93, %cst_40 {dimension_numbers = #tpu.dot_dimension_numbers<[1], [0], [0], [1], [0, 0, 1, 1], [], []>} : vector<48x128xf32>, vector<128x128xf32>, vector<48x128xf32> -> vector<48x128xf32>
    %95 = arith.addf %90, %94 : vector<48x128xf32>
    %c0_41 = arith.constant 0 : index
    %c0_42 = arith.constant 0 : index
    %96 = vector.load %arg3[%c0_41, %c0_42] : memref<4x4xf32, #tpu.memory_space<vmem>>, vector<1x4xf32>
    %c1_43 = arith.constant 1 : index
    %c0_44 = arith.constant 0 : index
    %97 = vector.load %arg3[%c1_43, %c0_44] : memref<4x4xf32, #tpu.memory_space<vmem>>, vector<1x4xf32>
    %98 = vector.broadcast %81 : vector<48x1xf32> to vector<48x128xf32>
    %99 = arith.mulf %95, %98 : vector<48x128xf32>
    %cst_45 = arith.constant dense<0.000000e+00> : vector<128xf32>
    %100 = vector.multi_reduction <add>, %99, %cst_45 [0] : vector<48x128xf32> to vector<128xf32>
    %101 = vector.shape_cast %100 : vector<128xf32> to vector<1x128xf32>
    %102 = arith.mulf %99, %95 : vector<48x128xf32>
    %cst_46 = arith.constant dense<0.000000e+00> : vector<128xf32>
    %103 = vector.multi_reduction <add>, %102, %cst_46 [0] : vector<48x128xf32> to vector<128xf32>
    %104 = vector.shape_cast %103 : vector<128xf32> to vector<1x128xf32>
    %105 = tpu.concatenate %101, %104 in 0 : vector<1x128xf32>, vector<1x128xf32> -> vector<2x128xf32>
    %cst_47 = arith.constant dense<0.000000e+00> : vector<2x4xf32>
    %106 = tpu.matmul %105, %33, %cst_47 {dimension_numbers = #tpu.dot_dimension_numbers<[1], [0], [0], [1], [0, 0, 1, 1], [], []>} : vector<2x128xf32>, vector<128x4xf32>, vector<2x4xf32> -> vector<2x4xf32>
    %107 = vector.extract_strided_slice %106 {offsets = [0, 0], sizes = [1, 4], strides = [1, 1]} : vector<2x4xf32> to vector<1x4xf32>
    %cst_48 = arith.constant 0.001953125 : f32
    %108 = vector.broadcast %cst_48 : f32 to vector<1x4xf32>
    %109 = arith.mulf %107, %108 : vector<1x4xf32>
    %110 = vector.extract_strided_slice %106 {offsets = [1, 0], sizes = [1, 4], strides = [1, 1]} : vector<2x4xf32> to vector<1x4xf32>
    %cst_49 = arith.constant 0.001953125 : f32
    %111 = vector.broadcast %cst_49 : f32 to vector<1x4xf32>
    %112 = arith.mulf %110, %111 : vector<1x4xf32>
    %113 = arith.mulf %109, %109 : vector<1x4xf32>
    %114 = arith.subf %112, %113 : vector<1x4xf32>
    %cst_50 = arith.constant 9.99999974E-6 : f32
    %115 = vector.broadcast %cst_50 : f32 to vector<1x4xf32>
    %116 = arith.addf %114, %115 : vector<1x4xf32>
    %117 = math.rsqrt %116 : vector<1x4xf32>
    %118 = arith.mulf %96, %117 : vector<1x4xf32>
    %119 = arith.mulf %109, %118 : vector<1x4xf32>
    %120 = arith.subf %97, %119 : vector<1x4xf32>
    %121 = tpu.concatenate %118, %120 in 0 : vector<1x4xf32>, vector<1x4xf32> -> vector<2x4xf32>
    %cst_51 = arith.constant dense<0.000000e+00> : vector<2x128xf32>
    %122 = tpu.matmul %121, %57, %cst_51 {dimension_numbers = #tpu.dot_dimension_numbers<[1], [0], [0], [1], [0, 0, 1, 1], [], []>} : vector<2x4xf32>, vector<4x128xf32>, vector<2x128xf32> -> vector<2x128xf32>
    %123 = vector.extract_strided_slice %122 {offsets = [0, 0], sizes = [1, 128], strides = [1, 1]} : vector<2x128xf32> to vector<1x128xf32>
    %124 = vector.broadcast %123 : vector<1x128xf32> to vector<48x128xf32>
    %125 = arith.mulf %95, %124 : vector<48x128xf32>
    %126 = vector.extract_strided_slice %122 {offsets = [1, 0], sizes = [1, 128], strides = [1, 1]} : vector<2x128xf32> to vector<1x128xf32>
    %127 = vector.broadcast %126 : vector<1x128xf32> to vector<48x128xf32>
    %128 = arith.addf %125, %127 : vector<48x128xf32>
    %cst_52 = arith.constant 0.000000e+00 : f32
    %129 = vector.broadcast %cst_52 : f32 to vector<48x128xf32>
    %130 = arith.maximumf %128, %129 : vector<48x128xf32>
    %131 = vector.broadcast %81 : vector<48x1xf32> to vector<48x128xf32>
    %132 = arith.mulf %130, %131 : vector<48x128xf32>
    %c7_53 = arith.constant 7 : index
    %c0_54 = arith.constant 0 : index
    %133 = vector.load %arg6[%c7_53, %c0_54] : memref<56x128xf32, #tpu.memory_space<vmem>>, vector<48x128xf32>
    tpu.vector_store %arg6[%c7_53, %c0_54], %132 {strides = array<i32>} : memref<56x128xf32, #tpu.memory_space<vmem>>, vector<48x128xf32>,
    %c6_55 = arith.constant 6 : index
    %c0_56 = arith.constant 0 : index
    %134 = vector.load %arg6[%c6_55, %c0_56] : memref<56x128xf32, #tpu.memory_space<vmem>>, vector<48x128xf32>
    %c0_57 = arith.constant 0 : index
    %c0_58 = arith.constant 0 : index
    %c0_59 = arith.constant 0 : index
    %135 = vector.load %arg2[%c0_57, %c0_58, %c0_59] : memref<3x128x128xf32, #tpu.memory_space<vmem>>, vector<1x128x128xf32>
    %136 = vector.shape_cast %135 : vector<1x128x128xf32> to vector<128x128xf32>
    %cst_60 = arith.constant dense<0.000000e+00> : vector<48x128xf32>
    %137 = tpu.matmul %134, %136, %cst_60 {dimension_numbers = #tpu.dot_dimension_numbers<[1], [0], [0], [1], [0, 0, 1, 1], [], []>} : vector<48x128xf32>, vector<128x128xf32>, vector<48x128xf32> -> vector<48x128xf32>
    %c7_61 = arith.constant 7 : index
    %c0_62 = arith.constant 0 : index
    %138 = vector.load %arg6[%c7_61, %c0_62] : memref<56x128xf32, #tpu.memory_space<vmem>>, vector<48x128xf32>
    %c1_63 = arith.constant 1 : index
    %c0_64 = arith.constant 0 : index
    %c0_65 = arith.constant 0 : index
    %139 = vector.load %arg2[%c1_63, %c0_64, %c0_65] : memref<3x128x128xf32, #tpu.memory_space<vmem>>, vector<1x128x128xf32>
    %140 = vector.shape_cast %139 : vector<1x128x128xf32> to vector<128x128xf32>
    %cst_66 = arith.constant dense<0.000000e+00> : vector<48x128xf32>
    %141 = tpu.matmul %138, %140, %cst_66 {dimension_numbers = #tpu.dot_dimension_numbers<[1], [0], [0], [1], [0, 0, 1, 1], [], []>} : vector<48x128xf32>, vector<128x128xf32>, vector<48x128xf32> -> vector<48x128xf32>
    %142 = arith.addf %137, %141 : vector<48x128xf32>
    %c8_67 = arith.constant 8 : index
    %c0_68 = arith.constant 0 : index
    %143 = vector.load %arg6[%c8_67, %c0_68] : memref<56x128xf32, #tpu.memory_space<vmem>>, vector<48x128xf32>
    %c2_69 = arith.constant 2 : index
    %c0_70 = arith.constant 0 : index
    %c0_71 = arith.constant 0 : index
    %144 = vector.load %arg2[%c2_69, %c0_70, %c0_71] : memref<3x128x128xf32, #tpu.memory_space<vmem>>, vector<1x128x128xf32>
    %145 = vector.shape_cast %144 : vector<1x128x128xf32> to vector<128x128xf32>
    %cst_72 = arith.constant dense<0.000000e+00> : vector<48x128xf32>
    %146 = tpu.matmul %143, %145, %cst_72 {dimension_numbers = #tpu.dot_dimension_numbers<[1], [0], [0], [1], [0, 0, 1, 1], [], []>} : vector<48x128xf32>, vector<128x128xf32>, vector<48x128xf32> -> vector<48x128xf32>
    %147 = arith.addf %142, %146 : vector<48x128xf32>
    %c2_73 = arith.constant 2 : index
    %c0_74 = arith.constant 0 : index
    %148 = vector.load %arg3[%c2_73, %c0_74] : memref<4x4xf32, #tpu.memory_space<vmem>>, vector<1x4xf32>
    %c3 = arith.constant 3 : index
    %c0_75 = arith.constant 0 : index
    %149 = vector.load %arg3[%c3, %c0_75] : memref<4x4xf32, #tpu.memory_space<vmem>>, vector<1x4xf32>
    %150 = vector.broadcast %81 : vector<48x1xf32> to vector<48x128xf32>
    %151 = arith.mulf %147, %150 : vector<48x128xf32>
    %cst_76 = arith.constant dense<0.000000e+00> : vector<128xf32>
    %152 = vector.multi_reduction <add>, %151, %cst_76 [0] : vector<48x128xf32> to vector<128xf32>
    %153 = vector.shape_cast %152 : vector<128xf32> to vector<1x128xf32>
    %154 = arith.mulf %151, %147 : vector<48x128xf32>
    %cst_77 = arith.constant dense<0.000000e+00> : vector<128xf32>
    %155 = vector.multi_reduction <add>, %154, %cst_77 [0] : vector<48x128xf32> to vector<128xf32>
    %156 = vector.shape_cast %155 : vector<128xf32> to vector<1x128xf32>
    %157 = tpu.concatenate %153, %156 in 0 : vector<1x128xf32>, vector<1x128xf32> -> vector<2x128xf32>
    %cst_78 = arith.constant dense<0.000000e+00> : vector<2x4xf32>
    %158 = tpu.matmul %157, %33, %cst_78 {dimension_numbers = #tpu.dot_dimension_numbers<[1], [0], [0], [1], [0, 0, 1, 1], [], []>} : vector<2x128xf32>, vector<128x4xf32>, vector<2x4xf32> -> vector<2x4xf32>
    %159 = vector.extract_strided_slice %158 {offsets = [0, 0], sizes = [1, 4], strides = [1, 1]} : vector<2x4xf32> to vector<1x4xf32>
    %cst_79 = arith.constant 0.001953125 : f32
    %160 = vector.broadcast %cst_79 : f32 to vector<1x4xf32>
    %161 = arith.mulf %159, %160 : vector<1x4xf32>
    %162 = vector.extract_strided_slice %158 {offsets = [1, 0], sizes = [1, 4], strides = [1, 1]} : vector<2x4xf32> to vector<1x4xf32>
    %cst_80 = arith.constant 0.001953125 : f32
    %163 = vector.broadcast %cst_80 : f32 to vector<1x4xf32>
    %164 = arith.mulf %162, %163 : vector<1x4xf32>
    %165 = arith.mulf %161, %161 : vector<1x4xf32>
    %166 = arith.subf %164, %165 : vector<1x4xf32>
    %cst_81 = arith.constant 9.99999974E-6 : f32
    %167 = vector.broadcast %cst_81 : f32 to vector<1x4xf32>
    %168 = arith.addf %166, %167 : vector<1x4xf32>
    %169 = math.rsqrt %168 : vector<1x4xf32>
    %170 = arith.mulf %148, %169 : vector<1x4xf32>
    %171 = arith.mulf %161, %170 : vector<1x4xf32>
    %172 = arith.subf %149, %171 : vector<1x4xf32>
    %173 = tpu.concatenate %170, %172 in 0 : vector<1x4xf32>, vector<1x4xf32> -> vector<2x4xf32>
    %cst_82 = arith.constant dense<0.000000e+00> : vector<2x128xf32>
    %174 = tpu.matmul %173, %57, %cst_82 {dimension_numbers = #tpu.dot_dimension_numbers<[1], [0], [0], [1], [0, 0, 1, 1], [], []>} : vector<2x4xf32>, vector<4x128xf32>, vector<2x128xf32> -> vector<2x128xf32>
    %175 = vector.extract_strided_slice %174 {offsets = [0, 0], sizes = [1, 128], strides = [1, 1]} : vector<2x128xf32> to vector<1x128xf32>
    %176 = vector.broadcast %175 : vector<1x128xf32> to vector<48x128xf32>
    %177 = arith.mulf %147, %176 : vector<48x128xf32>
    %178 = vector.extract_strided_slice %174 {offsets = [1, 0], sizes = [1, 128], strides = [1, 1]} : vector<2x128xf32> to vector<1x128xf32>
    %179 = vector.broadcast %178 : vector<1x128xf32> to vector<48x128xf32>
    %180 = arith.addf %177, %179 : vector<48x128xf32>
    %cst_83 = arith.constant 0.000000e+00 : f32
    %181 = vector.broadcast %cst_83 : f32 to vector<48x128xf32>
    %182 = arith.maximumf %180, %181 : vector<48x128xf32>
    %c7_84 = arith.constant 7 : index
    %c0_85 = arith.constant 0 : index
    %183 = vector.load %arg5[%c7_84, %c0_85] : memref<56x128xf32, #tpu.memory_space<vmem>>, vector<48x128xf32>
    %184 = arith.addf %183, %182 : vector<48x128xf32>
    %cst_86 = arith.constant 0.000000e+00 : f32
    %185 = vector.broadcast %cst_86 : f32 to vector<48x128xf32>
    %186 = arith.maximumf %184, %185 : vector<48x128xf32>
    %c0_87 = arith.constant 0 : index
    %c0_88 = arith.constant 0 : index
    %187 = vector.load %arg4[%c0_87, %c0_88] : memref<48x128xf32, #tpu.memory_space<vmem>>, vector<48x128xf32>
    tpu.vector_store %arg4[%c0_87, %c0_88], %186 {strides = array<i32>} : memref<48x128xf32, #tpu.memory_space<vmem>>, vector<48x128xf32>,
    return
  }
}

</mosaic_0001>

<llo_original>
// kernel: tpu_custom_call.1
$region0: #{tpu_custom_call.1}
  #allocation0 [shape = 'u32[]', space=smem, size = 0x4, offset = 0x4, fixed_abs, tag = 'smem constant byte address 0x4 - core index']
  #allocation1 [shape = 'u32[144,128]{1,0:T(1,128)}', space=vmem, size = 0x12000, scoped, tag = 'internal scratch']
  #allocation2 [shape = 'f32[56,128]{1,0:T(8,128)}', space=vmem, size = 0x7000, scoped, tag = 'scratch operand']
  #allocation3 [shape = 'f32[56,128]{1,0:T(8,128)}', space=vmem, size = 0x7000, scoped, tag = 'scratch operand']
  %s0 = inlined_call_operand.hbm [shape: f32[32,64], index: 0, kind: input, shape index: {}]
  %s1 = inlined_call_operand.hbm [shape: f32[3,128,128], index: 1, kind: input, shape index: {}]
  %s2 = inlined_call_operand.hbm [shape: f32[3,128,128], index: 2, kind: input, shape index: {}]
  %s3 = inlined_call_operand.vmem [shape: f32[4,4], index: 3, kind: input, shape index: {}]
  %s4 = inlined_call_operand.hbm [shape: f32[48,128], index: 4, kind: output, shape index: {}]
  %s5 = sld [smem:[#allocation0]]
  $region38: #{tpu_custom_call.1} parent=0
    _
  %s7 = ssub.s32 1, %s5
  %s8 = scalar_select 0, %s7, %s5
  $region1: #{tpu_custom_call.1} parent=0
    #allocation4 [shape = 'u8[16384]{0}', space=vmem, size = 0x4000, scoped, tag = 'input window, operand 0, single buffered']
    #allocation5 [shape = 's32[1]{0}', space=sflag, size = 0x4, scoped, tag = 'scoped memory for tpu_custom_call.1']
    #allocation6 [shape = 's32[1]{0}', space=sflag, size = 0x4, scoped, tag = 'scoped memory for tpu_custom_call.1']
    #allocation7 [shape = 'u8[196608]{0}', space=vmem, size = 0x30000, scoped, tag = 'input window, operand 1, single buffered']
    #allocation8 [shape = 's32[1]{0}', space=sflag, size = 0x4, scoped, tag = 'scoped memory for tpu_custom_call.1']
    #allocation9 [shape = 'u8[196608]{0}', space=vmem, size = 0x30000, scoped, tag = 'input window, operand 2, single buffered']
    #allocation10 [shape = 'u8[24576]{0}', space=vmem, size = 0x6000, scoped, tag = 'output window, operand 0, single buffered']
    %9 = vsyncpa [#allocation5], 0
    %10 = vsyncpa [#allocation8], 0
    %11 = vsyncpa [#allocation6], 0
    // Predicated region
    $region2: #{tpu_custom_call.1} parent=1 // pred_check
      _
    $region3: #{tpu_custom_call.1} parent=1 // pred_check_branch
      %13 = sbr.rel (0) target = $region5
    $region4: #{tpu_custom_call.1} parent=1 // pred_region
      %s15 = ssub.s32 512, 512
      %16 = vsyncadd [#allocation5], %s15
      %s17 = sshll.u32 [#allocation4], 4
      %s18 = int_to_ptr.vmem [resolvable:$true] %s17
      %23 = dma.hbm_to_vmem [thread:$0]  %s0, 512, %s18, [#allocation5], 128, 128, 8
    $region5: #{tpu_custom_call.1} parent=1 // pred_fallthru
      _
    // Predicated region
    $region6: #{tpu_custom_call.1} parent=1 // pred_check
      _
    $region7: #{tpu_custom_call.1} parent=1 // pred_check_branch
      %25 = sbr.rel (0) target = $region9
    $region8: #{tpu_custom_call.1} parent=1 // pred_region
      %s27 = ssub.s32 6144, 6144
      %28 = vsyncadd [#allocation8], %s27
      %s29 = sshll.u32 [#allocation7], 4
      %s30 = int_to_ptr.vmem [resolvable:$true] %s29
      %35 = dma.hbm_to_vmem [thread:$0]  %s1, 6144, %s30, [#allocation8], 128, 128, 8
    $region9: #{tpu_custom_call.1} parent=1 // pred_fallthru
      _
    // Predicated region
    $region10: #{tpu_custom_call.1} parent=1 // pred_check
      _
    $region11: #{tpu_custom_call.1} parent=1 // pred_check_branch
      %37 = sbr.rel (0) target = $region13
    $region12: #{tpu_custom_call.1} parent=1 // pred_region
      %s39 = ssub.s32 6144, 6144
      %40 = vsyncadd [#allocation8], %s39
      %s41 = sshll.u32 [#allocation9], 4
      %s42 = int_to_ptr.vmem [resolvable:$true] %s41
      %47 = dma.hbm_to_vmem [thread:$0]  %s2, 6144, %s42, [#allocation8], 128, 128, 8
    $region13: #{tpu_custom_call.1} parent=1 // pred_fallthru
      _
    // Predicated region
    $region14: #{tpu_custom_call.1} parent=1 // pred_check
      _
    $region15: #{tpu_custom_call.1} parent=1 // pred_check_branch
      %49 = sbr.rel (0) target = $region17
    $region16: #{tpu_custom_call.1} parent=1 // pred_region
      _
    $region17: #{tpu_custom_call.1} parent=1 // pred_fallthru
      _
    // Predicated region
    $region18: #{tpu_custom_call.1} parent=1 // pred_check
      _
    $region19: #{tpu_custom_call.1} parent=1 // pred_check_branch
      %51 = sbr.rel (0) target = $region21
    $region20: #{tpu_custom_call.1} parent=1 // pred_region
      %52 = dma.done [#allocation5], 512
    $region21: #{tpu_custom_call.1} parent=1 // pred_fallthru
      _
    // Predicated region
    $region22: #{tpu_custom_call.1} parent=1 // pred_check
      _
    $region23: #{tpu_custom_call.1} parent=1 // pred_check_branch
      %54 = sbr.rel (0) target = $region25
    $region24: #{tpu_custom_call.1} parent=1 // pred_region
      %55 = dma.done [#allocation8], 6144
    $region25: #{tpu_custom_call.1} parent=1 // pred_fallthru
      _
    // Predicated region
    $region26: #{tpu_custom_call.1} parent=1 // pred_check
      _
    $region27: #{tpu_custom_call.1} parent=1 // pred_check_branch
      %57 = sbr.rel (0) target = $region29
    $region28: #{tpu_custom_call.1} parent=1 // pred_region
      %58 = dma.done [#allocation8], 6144
    $region29: #{tpu_custom_call.1} parent=1 // pred_fallthru
      _
    %59 = vst [vmem:[#allocation2] sm:$0xff] 0.0
    %60 = vst [vmem:[#allocation2 + $0x8] sm:$0xff] 0.0
    %61 = vst [vmem:[#allocation2 + $0x10] sm:$0xff] 0.0
    %62 = vst [vmem:[#allocation2 + $0x18] sm:$0xff] 0.0
    %63 = vst [vmem:[#allocation2 + $0x20] sm:$0xff] 0.0
    %64 = vst [vmem:[#allocation2 + $0x28] sm:$0xff] 0.0
    %65 = vst [vmem:[#allocation2 + $0x30] sm:$0xff] 0.0
    %v66 = vld [vmem:[#allocation4] sm:$0xff]
    %v67 = vld [vmem:[#allocation4 + $0x8] sm:$0xff]
    %vm68 = vcmask 523264
    %69 = vst.msk [vmem:[#allocation2 + $0x8] sm:$0xff] %vm68, %v66
    %70 = vst.msk [vmem:[#allocation2 + $0x10] sm:$0xff] %vm68, %v67
    %v71 = vld [vmem:[#allocation4 + $0x10] sm:$0xff]
    %v72 = vld [vmem:[#allocation4 + $0x18] sm:$0xff]
    %73 = vst.msk [vmem:[#allocation2 + $0x20] sm:$0xff] %vm68, %v71
    %74 = vst.msk [vmem:[#allocation2 + $0x28] sm:$0xff] %vm68, %v72
    %75 = vst [vmem:[#allocation3] sm:$0x7f] 0.0
    %76 = vst [vmem:[#allocation3 + $0x37] sm:$0x1] 0.0
    %v77 = vlaneseq
    %v78 = vshrl.u32 %v77, 7
    %v79 = vadd.s32 %v78, 8
    %v80 = vadd.s32 %v78, 16
    %v81 = vadd.s32 %v78, 24
    %v82 = vadd.s32 %v78, 32
    %v83 = vadd.s32 %v78, 40
    %v84 = vadd.s32 %v78, 48
    %v85 = vadd.s32 %v78, 56
    %v86 = vadd.s32 %v78, 64
    %v87 = vadd.s32 %v78, 72
    %v88 = vadd.s32 %v78, 80
    %v89 = vadd.s32 %v78, 88
    %v90 = vadd.s32 %v78, 96
    %v91 = vadd.s32 %v78, 104
    %v92 = vadd.s32 %v78, 112
    %v93 = vadd.s32 %v78, 120
    %v94 = vlaneseq
    %v95 = vand.u32 %v94, 127
    %vm96 = vcmp.lt.s32.totalorder %v78, 0
    %v97 = vsub.s32 0, %v78
    %v98 = vsel %vm96, %v97, %v78
    %v99 = vshrl.u32 %v98, 2
    %v100 = vand.u32 %v98, 3
    %v101 = vsub.s32 0, %v100
    %v102 = vsel %vm96, %v101, %v100
    %vm103 = vcmp.lt.s32.totalorder %v79, 0
    %v104 = vsub.s32 0, %v79
    %v105 = vsel %vm103, %v104, %v79
    %v106 = vshrl.u32 %v105, 2
    %v107 = vand.u32 %v105, 3
    %v108 = vsub.s32 0, %v107
    %v109 = vsel %vm103, %v108, %v107
    %vm110 = vcmp.lt.s32.totalorder %v80, 0
    %v111 = vsub.s32 0, %v80
    %v112 = vsel %vm110, %v111, %v80
    %v113 = vshrl.u32 %v112, 2
    %v114 = vand.u32 %v112, 3
    %v115 = vsub.s32 0, %v114
    %v116 = vsel %vm110, %v115, %v114
    %vm117 = vcmp.lt.s32.totalorder %v81, 0
    %v118 = vsub.s32 0, %v81
    %v119 = vsel %vm117, %v118, %v81
    %v120 = vshrl.u32 %v119, 2
    %v121 = vand.u32 %v119, 3
    %v122 = vsub.s32 0, %v121
    %v123 = vsel %vm117, %v122, %v121
    %vm124 = vcmp.lt.s32.totalorder %v82, 0
    %v125 = vsub.s32 0, %v82
    %v126 = vsel %vm124, %v125, %v82
    %v127 = vshrl.u32 %v126, 2
    %v128 = vand.u32 %v126, 3
    %v129 = vsub.s32 0, %v128
    %v130 = vsel %vm124, %v129, %v128
    %vm131 = vcmp.lt.s32.totalorder %v83, 0
    %v132 = vsub.s32 0, %v83
    %v133 = vsel %vm131, %v132, %v83
    %v134 = vshrl.u32 %v133, 2
    %v135 = vand.u32 %v133, 3
    %v136 = vsub.s32 0, %v135
    %v137 = vsel %vm131, %v136, %v135
    %vm138 = vcmp.lt.s32.totalorder %v84, 0
    %v139 = vsub.s32 0, %v84
    %v140 = vsel %vm138, %v139, %v84
    %v141 = vshrl.u32 %v140, 2
    %v142 = vand.u32 %v140, 3
    %v143 = vsub.s32 0, %v142
    %v144 = vsel %vm138, %v143, %v142
    %vm145 = vcmp.lt.s32.totalorder %v85, 0
    %v146 = vsub.s32 0, %v85
    %v147 = vsel %vm145, %v146, %v85
    %v148 = vshrl.u32 %v147, 2
    %v149 = vand.u32 %v147, 3
    %v150 = vsub.s32 0, %v149
    %v151 = vsel %vm145, %v150, %v149
    %vm152 = vcmp.lt.s32.totalorder %v86, 0
    %v153 = vsub.s32 0, %v86
    %v154 = vsel %vm152, %v153, %v86
    %v155 = vshrl.u32 %v154, 2
    %v156 = vand.u32 %v154, 3
    %v157 = vsub.s32 0, %v156
    %v158 = vsel %vm152, %v157, %v156
    %vm159 = vcmp.lt.s32.totalorder %v87, 0
    %v160 = vsub.s32 0, %v87
    %v161 = vsel %vm159, %v160, %v87
    %v162 = vshrl.u32 %v161, 2
    %v163 = vand.u32 %v161, 3
    %v164 = vsub.s32 0, %v163
    %v165 = vsel %vm159, %v164, %v163
    %vm166 = vcmp.lt.s32.totalorder %v88, 0
    %v167 = vsub.s32 0, %v88
    %v168 = vsel %vm166, %v167, %v88
    %v169 = vshrl.u32 %v168, 2
    %v170 = vand.u32 %v168, 3
    %v171 = vsub.s32 0, %v170
    %v172 = vsel %vm166, %v171, %v170
    %vm173 = vcmp.lt.s32.totalorder %v89, 0
    %v174 = vsub.s32 0, %v89
    %v175 = vsel %vm173, %v174, %v89
    %v176 = vshrl.u32 %v175, 2
    %v177 = vand.u32 %v175, 3
    %v178 = vsub.s32 0, %v177
    %v179 = vsel %vm173, %v178, %v177
    %vm180 = vcmp.lt.s32.totalorder %v90, 0
    %v181 = vsub.s32 0, %v90
    %v182 = vsel %vm180, %v181, %v90
    %v183 = vshrl.u32 %v182, 2
    %v184 = vand.u32 %v182, 3
    %v185 = vsub.s32 0, %v184
    %v186 = vsel %vm180, %v185, %v184
    %vm187 = vcmp.lt.s32.totalorder %v91, 0
    %v188 = vsub.s32 0, %v91
    %v189 = vsel %vm187, %v188, %v91
    %v190 = vshrl.u32 %v189, 2
    %v191 = vand.u32 %v189, 3
    %v192 = vsub.s32 0, %v191
    %v193 = vsel %vm187, %v192, %v191
    %vm194 = vcmp.lt.s32.totalorder %v92, 0
    %v195 = vsub.s32 0, %v92
    %v196 = vsel %vm194, %v195, %v92
    %v197 = vshrl.u32 %v196, 2
    %v198 = vand.u32 %v196, 3
    %v199 = vsub.s32 0, %v198
    %v200 = vsel %vm194, %v199, %v198
    %vm201 = vcmp.lt.s32.totalorder %v93, 0
    %v202 = vsub.s32 0, %v93
    %v203 = vsel %vm201, %v202, %v93
    %v204 = vshrl.u32 %v203, 2
    %v205 = vand.u32 %v203, 3
    %v206 = vsub.s32 0, %v205
    %v207 = vsel %vm201, %v206, %v205
    %vm208 = vcmp.ne.s32.totalorder %v102, 0
    %vm209 = vcmp.ne.s32.totalorder %v109, 0
    %vm210 = vcmp.ne.s32.totalorder %v116, 0
    %vm211 = vcmp.ne.s32.totalorder %v123, 0
    %vm212 = vcmp.ne.s32.totalorder %v130, 0
    %vm213 = vcmp.ne.s32.totalorder %v137, 0
    %vm214 = vcmp.ne.s32.totalorder %v144, 0
    %vm215 = vcmp.ne.s32.totalorder %v151, 0
    %vm216 = vcmp.ne.s32.totalorder %v158, 0
    %vm217 = vcmp.ne.s32.totalorder %v165, 0
    %vm218 = vcmp.ne.s32.totalorder %v172, 0
    %vm219 = vcmp.ne.s32.totalorder %v179, 0
    %vm220 = vcmp.ne.s32.totalorder %v186, 0
    %vm221 = vcmp.ne.s32.totalorder %v193, 0
    %vm222 = vcmp.ne.s32.totalorder %v200, 0
    %vm223 = vcmp.ne.s32.totalorder %v207, 0
    %vm224 = vcmp.lt.s32.totalorder %v102, 0
    %vm225 = vcmp.lt.s32.totalorder %v109, 0
    %vm226 = vcmp.lt.s32.totalorder %v116, 0
    %vm227 = vcmp.lt.s32.totalorder %v123, 0
    %vm228 = vcmp.lt.s32.totalorder %v130, 0
    %vm229 = vcmp.lt.s32.totalorder %v137, 0
    %vm230 = vcmp.lt.s32.totalorder %v144, 0
    %vm231 = vcmp.lt.s32.totalorder %v151, 0
    %vm232 = vcmp.lt.s32.totalorder %v158, 0
    %vm233 = vcmp.lt.s32.totalorder %v165, 0
    %vm234 = vcmp.lt.s32.totalorder %v172, 0
    %vm235 = vcmp.lt.s32.totalorder %v179, 0
    %vm236 = vcmp.lt.s32.totalorder %v186, 0
    %vm237 = vcmp.lt.s32.totalorder %v193, 0
    %vm238 = vcmp.lt.s32.totalorder %v200, 0
    %vm239 = vcmp.lt.s32.totalorder %v207, 0
    %vm240 = vmand %vm224, %vm208
    %vm241 = vmand %vm225, %vm209
    %vm242 = vmand %vm226, %vm210
    %vm243 = vmand %vm227, %vm211
    %vm244 = vmand %vm228, %vm212
    %vm245 = vmand %vm229, %vm213
    %vm246 = vmand %vm230, %vm214
    %vm247 = vmand %vm231, %vm215
    %vm248 = vmand %vm232, %vm216
    %vm249 = vmand %vm233, %vm217
    %vm250 = vmand %vm234, %vm218
    %vm251 = vmand %vm235, %vm219
    %vm252 = vmand %vm236, %vm220
    %vm253 = vmand %vm237, %vm221
    %vm254 = vmand %vm238, %vm222
    %vm255 = vmand %vm239, %vm223
    %v256 = vadd.s32 %v102, 4
    %v257 = vadd.s32 %v109, 4
    %v258 = vadd.s32 %v116, 4
    %v259 = vadd.s32 %v123, 4
    %v260 = vadd.s32 %v130, 4
    %v261 = vadd.s32 %v137, 4
    %v262 = vadd.s32 %v144, 4
    %v263 = vadd.s32 %v151, 4
    %v264 = vadd.s32 %v158, 4
    %v265 = vadd.s32 %v165, 4
    %v266 = vadd.s32 %v172, 4
    %v267 = vadd.s32 %v179, 4
    %v268 = vadd.s32 %v186, 4
    %v269 = vadd.s32 %v193, 4
    %v270 = vadd.s32 %v200, 4
    %v271 = vadd.s32 %v207, 4
    %v272 = vsel %vm240, %v256, %v102
    %v273 = vsel %vm241, %v257, %v109
    %v274 = vsel %vm242, %v258, %v116
    %v275 = vsel %vm243, %v259, %v123
    %v276 = vsel %vm244, %v260, %v130
    %v277 = vsel %vm245, %v261, %v137
    %v278 = vsel %vm246, %v262, %v144
    %v279 = vsel %vm247, %v263, %v151
    %v280 = vsel %vm248, %v264, %v158
    %v281 = vsel %vm249, %v265, %v165
    %v282 = vsel %vm250, %v266, %v172
    %v283 = vsel %vm251, %v267, %v179
    %v284 = vsel %vm252, %v268, %v186
    %v285 = vsel %vm253, %v269, %v193
    %v286 = vsel %vm254, %v270, %v200
    %v287 = vsel %vm255, %v271, %v207
    %vm288 = vcmp.eq.s32.totalorder %v272, %v95
    %vm289 = vcmp.eq.s32.totalorder %v273, %v95
    %vm290 = vcmp.eq.s32.totalorder %v274, %v95
    %vm291 = vcmp.eq.s32.totalorder %v275, %v95
    %vm292 = vcmp.eq.s32.totalorder %v276, %v95
    %vm293 = vcmp.eq.s32.totalorder %v277, %v95
    %vm294 = vcmp.eq.s32.totalorder %v278, %v95
    %vm295 = vcmp.eq.s32.totalorder %v279, %v95
    %vm296 = vcmp.eq.s32.totalorder %v280, %v95
    %vm297 = vcmp.eq.s32.totalorder %v281, %v95
    %vm298 = vcmp.eq.s32.totalorder %v282, %v95
    %vm299 = vcmp.eq.s32.totalorder %v283, %v95
    %vm300 = vcmp.eq.s32.totalorder %v284, %v95
    %vm301 = vcmp.eq.s32.totalorder %v285, %v95
    %vm302 = vcmp.eq.s32.totalorder %v286, %v95
    %vm303 = vcmp.eq.s32.totalorder %v287, %v95
    %vm304 = vcmp.lt.s32.totalorder %v78, 64
    %vm305 = vcmp.lt.s32.totalorder %v79, 64
    %vm306 = vcmp.lt.s32.totalorder %v80, 64
    %vm307 = vcmp.lt.s32.totalorder %v81, 64
    %vm308 = vcmp.lt.s32.totalorder %v82, 64
    %vm309 = vcmp.lt.s32.totalorder %v83, 64
    %vm310 = vcmp.lt.s32.totalorder %v84, 64
    %vm311 = vcmp.lt.s32.totalorder %v85, 64
    %vm312 = vcmp.lt.s32.totalorder %v86, 64
    %vm313 = vcmp.lt.s32.totalorder %v87, 64
    %vm314 = vcmp.lt.s32.totalorder %v88, 64
    %vm315 = vcmp.lt.s32.totalorder %v89, 64
    %vm316 = vcmp.lt.s32.totalorder %v90, 64
    %vm317 = vcmp.lt.s32.totalorder %v91, 64
    %vm318 = vcmp.lt.s32.totalorder %v92, 64
    %vm319 = vcmp.lt.s32.totalorder %v93, 64
    %vm320 = vmand %vm288, %vm304
    %vm321 = vmand %vm289, %vm305
    %vm322 = vmand %vm290, %vm306
    %vm323 = vmand %vm291, %vm307
    %vm324 = vmand %vm292, %vm308
    %vm325 = vmand %vm293, %vm309
    %vm326 = vmand %vm294, %vm310
    %vm327 = vmand %vm295, %vm311
    %vm328 = vmand %vm296, %vm312
    %vm329 = vmand %vm297, %vm313
    %vm330 = vmand %vm298, %vm314
    %vm331 = vmand %vm299, %vm315
    %vm332 = vmand %vm300, %vm316
    %vm333 = vmand %vm301, %vm317
    %vm334 = vmand %vm302, %vm318
    %vm335 = vmand %vm303, %vm319
    %v336 = vsel %vm320, 1, 0
    %v337 = vsel %vm321, 1, 0
    %v338 = vsel %vm322, 1, 0
    %v339 = vsel %vm323, 1, 0
    %v340 = vsel %vm324, 1, 0
    %v341 = vsel %vm325, 1, 0
    %v342 = vsel %vm326, 1, 0
    %v343 = vsel %vm327, 1, 0
    %v344 = vsel %vm328, 1, 0
    %v345 = vsel %vm329, 1, 0
    %v346 = vsel %vm330, 1, 0
    %v347 = vsel %vm331, 1, 0
    %v348 = vsel %vm332, 1, 0
    %v349 = vsel %vm333, 1, 0
    %v350 = vsel %vm334, 1, 0
    %v351 = vsel %vm335, 1, 0
    %v352 = vcvt.s32.f32 %v336
    %v353 = vcvt.s32.f32 %v337
    %v354 = vcvt.s32.f32 %v338
    %v355 = vcvt.s32.f32 %v339
    %v356 = vcvt.s32.f32 %v340
    %v357 = vcvt.s32.f32 %v341
    %v358 = vcvt.s32.f32 %v342
    %v359 = vcvt.s32.f32 %v343
    %v360 = vcvt.s32.f32 %v344
    %v361 = vcvt.s32.f32 %v345
    %v362 = vcvt.s32.f32 %v346
    %v363 = vcvt.s32.f32 %v347
    %v364 = vcvt.s32.f32 %v348
    %v365 = vcvt.s32.f32 %v349
    %v366 = vcvt.s32.f32 %v350
    %v367 = vcvt.s32.f32 %v351
    %vm368 = vcmp.lt.s32.totalorder %v95, 0
    %v369 = vsub.s32 0, %v95
    %v370 = vsel %vm368, %v369, %v95
    %v371 = vshrl.u32 %v370, 2
    %v372 = vand.u32 %v370, 3
    %v373 = vsub.s32 0, %v372
    %v374 = vsel %vm368, %v373, %v372
    %vm375 = vcmp.ne.s32.totalorder %v374, 0
    %vm376 = vcmp.lt.s32.totalorder %v374, 0
    %vm377 = vmand %vm376, %vm375
    %v378 = vadd.s32 %v374, 4
    %v379 = vsel %vm377, %v378, %v374
    %vm380 = vcmp.eq.s32.totalorder %v379, %v78
    %vm381 = vcmp.lt.s32.totalorder %v95, 64
    %vm382 = vmand %vm380, %vm381
    %v383 = vsel %vm382, 1, 0
    %v384 = vcvt.s32.f32 %v383
    %vm385 = vcmp.lt.s32.totalorder %v78, 0
    %v386 = vsub.s32 0, %v78
    %v387 = vsel %vm385, %v386, %v78
    %v388 = vmul.u32.u64.compose %v387, 2863311531
    %v389 = vextract.low.u32 %v388
    %v390 = vextract.high.u32 %v388
    %v391 = vshrl.u32 %v390, 4
    %v392 = vmul.u32 %v391, 24
    %v393 = vsub.s32 %v387, %v392
    %v394 = vsub.s32 0, %v393
    %v395 = vsel %vm385, %v394, %v393
    %vm396 = vcmp.lt.s32.totalorder %v79, 0
    %v397 = vsub.s32 0, %v79
    %v398 = vsel %vm396, %v397, %v79
    %v399 = vmul.u32.u64.compose %v398, 2863311531
    %v400 = vextract.low.u32 %v399
    %v401 = vextract.high.u32 %v399
    %v402 = vshrl.u32 %v401, 4
    %v403 = vmul.u32 %v402, 24
    %v404 = vsub.s32 %v398, %v403
    %v405 = vsub.s32 0, %v404
    %v406 = vsel %vm396, %v405, %v404
    %vm407 = vcmp.lt.s32.totalorder %v80, 0
    %v408 = vsub.s32 0, %v80
    %v409 = vsel %vm407, %v408, %v80
    %v410 = vmul.u32.u64.compose %v409, 2863311531
    %v411 = vextract.low.u32 %v410
    %v412 = vextract.high.u32 %v410
    %v413 = vshrl.u32 %v412, 4
    %v414 = vmul.u32 %v413, 24
    %v415 = vsub.s32 %v409, %v414
    %v416 = vsub.s32 0, %v415
    %v417 = vsel %vm407, %v416, %v415
    %vm418 = vcmp.lt.s32.totalorder %v81, 0
    %v419 = vsub.s32 0, %v81
    %v420 = vsel %vm418, %v419, %v81
    %v421 = vmul.u32.u64.compose %v420, 2863311531
    %v422 = vextract.low.u32 %v421
    %v423 = vextract.high.u32 %v421
    %v424 = vshrl.u32 %v423, 4
    %v425 = vmul.u32 %v424, 24
    %v426 = vsub.s32 %v420, %v425
    %v427 = vsub.s32 0, %v426
    %v428 = vsel %vm418, %v427, %v426
    %vm429 = vcmp.lt.s32.totalorder %v82, 0
    %v430 = vsub.s32 0, %v82
    %v431 = vsel %vm429, %v430, %v82
    %v432 = vmul.u32.u64.compose %v431, 2863311531
    %v433 = vextract.low.u32 %v432
    %v434 = vextract.high.u32 %v432
    %v435 = vshrl.u32 %v434, 4
    %v436 = vmul.u32 %v435, 24
    %v437 = vsub.s32 %v431, %v436
    %v438 = vsub.s32 0, %v437
    %v439 = vsel %vm429, %v438, %v437
    %vm440 = vcmp.lt.s32.totalorder %v83, 0
    %v441 = vsub.s32 0, %v83
    %v442 = vsel %vm440, %v441, %v83
    %v443 = vmul.u32.u64.compose %v442, 2863311531
    %v444 = vextract.low.u32 %v443
    %v445 = vextract.high.u32 %v443
    %v446 = vshrl.u32 %v445, 4
    %v447 = vmul.u32 %v446, 24
    %v448 = vsub.s32 %v442, %v447
    %v449 = vsub.s32 0, %v448
    %v450 = vsel %vm440, %v449, %v448
    %vm451 = vcmp.ne.s32.totalorder %v395, 0
    %vm452 = vcmp.ne.s32.totalorder %v406, 0
    %vm453 = vcmp.ne.s32.totalorder %v417, 0
    %vm454 = vcmp.ne.s32.totalorder %v428, 0
    %vm455 = vcmp.ne.s32.totalorder %v439, 0
    %vm456 = vcmp.ne.s32.totalorder %v450, 0
    %vm457 = vcmp.lt.s32.totalorder %v395, 0
    %vm458 = vcmp.lt.s32.totalorder %v406, 0
    %vm459 = vcmp.lt.s32.totalorder %v417, 0
    %vm460 = vcmp.lt.s32.totalorder %v428, 0
    %vm461 = vcmp.lt.s32.totalorder %v439, 0
    %vm462 = vcmp.lt.s32.totalorder %v450, 0
    %vm463 = vmand %vm457, %vm451
    %vm464 = vmand %vm458, %vm452
    %vm465 = vmand %vm459, %vm453
    %vm466 = vmand %vm460, %vm454
    %vm467 = vmand %vm461, %vm455
    %vm468 = vmand %vm462, %vm456
    %v469 = vadd.s32 %v395, 24
    %v470 = vadd.s32 %v406, 24
    %v471 = vadd.s32 %v417, 24
    %v472 = vadd.s32 %v428, 24
    %v473 = vadd.s32 %v439, 24
    %v474 = vadd.s32 %v450, 24
    %v475 = vsel %vm463, %v469, %v395
    %v476 = vsel %vm464, %v470, %v406
    %v477 = vsel %vm465, %v471, %v417
    %v478 = vsel %vm466, %v472, %v428
    %v479 = vsel %vm467, %v473, %v439
    %v480 = vsel %vm468, %v474, %v450
    %vm481 = vcmp.ge.s32.totalorder %v475, 1
    %vm482 = vcmp.ge.s32.totalorder %v476, 1
    %vm483 = vcmp.ge.s32.totalorder %v477, 1
    %vm484 = vcmp.ge.s32.totalorder %v478, 1
    %vm485 = vcmp.ge.s32.totalorder %v479, 1
    %vm486 = vcmp.ge.s32.totalorder %v480, 1
    %vm487 = vcmp.le.s32.totalorder %v475, 16
    %vm488 = vcmp.le.s32.totalorder %v476, 16
    %vm489 = vcmp.le.s32.totalorder %v477, 16
    %vm490 = vcmp.le.s32.totalorder %v478, 16
    %vm491 = vcmp.le.s32.totalorder %v479, 16
    %vm492 = vcmp.le.s32.totalorder %v480, 16
    %vm493 = vmand %vm481, %vm487
    %vm494 = vmand %vm482, %vm488
    %vm495 = vmand %vm483, %vm489
    %vm496 = vmand %vm484, %vm490
    %vm497 = vmand %vm485, %vm491
    %vm498 = vmand %vm486, %vm492
    %v499 = vsel %vm493, 1, 0
    %v500 = vsel %vm494, 1, 0
    %v501 = vsel %vm495, 1, 0
    %v502 = vsel %vm496, 1, 0
    %v503 = vsel %vm497, 1, 0
    %v504 = vsel %vm498, 1, 0
    %v505 = vcvt.s32.f32 %v499
    %v506 = vcvt.s32.f32 %v500
    %v507 = vcvt.s32.f32 %v501
    %v508 = vcvt.s32.f32 %v502
    %v509 = vcvt.s32.f32 %v503
    %v510 = vcvt.s32.f32 %v504
    %v511 = vld [vmem:[#allocation2 + $0x6] sm:$0xff]
    %v512 = vld [vmem:[#allocation2 + $0xe] sm:$0xff]
    %v513 = vld [vmem:[#allocation2 + $0x16] sm:$0xff]
    %v514 = vld [vmem:[#allocation2 + $0x1e] sm:$0xff]
    %v515 = vld [vmem:[#allocation2 + $0x26] sm:$0xff]
    %v516 = vld [vmem:[#allocation2 + $0x2e] sm:$0xff]
    %v517 = vld [vmem:[#allocation7] sm:$0xff]
    %v518 = vld [vmem:[#allocation7 + $0x8] sm:$0xff]
    %v519 = vld [vmem:[#allocation7 + $0x10] sm:$0xff]
    %v520 = vld [vmem:[#allocation7 + $0x18] sm:$0xff]
    %v521 = vld [vmem:[#allocation7 + $0x20] sm:$0xff]
    %v522 = vld [vmem:[#allocation7 + $0x28] sm:$0xff]
    %v523 = vld [vmem:[#allocation7 + $0x30] sm:$0xff]
    %v524 = vld [vmem:[#allocation7 + $0x38] sm:$0xff]
    %v525 = vld [vmem:[#allocation7 + $0x40] sm:$0xff]
    %v526 = vld [vmem:[#allocation7 + $0x48] sm:$0xff]
    %v527 = vld [vmem:[#allocation7 + $0x50] sm:$0xff]
    %v528 = vld [vmem:[#allocation7 + $0x58] sm:$0xff]
    %v529 = vld [vmem:[#allocation7 + $0x60] sm:$0xff]
    %v530 = vld [vmem:[#allocation7 + $0x68] sm:$0xff]
    %v531 = vld [vmem:[#allocation7 + $0x70] sm:$0xff]
    %v532 = vld [vmem:[#allocation7 + $0x78] sm:$0xff]
    %v533 = vld [vmem:[#allocation2 + $0x7] sm:$0xff]
    %v534 = vld [vmem:[#allocation2 + $0xf] sm:$0xff]
    %v535 = vld [vmem:[#allocation2 + $0x17] sm:$0xff]
    %v536 = vld [vmem:[#allocation2 + $0x1f] sm:$0xff]
    %v537 = vld [vmem:[#allocation2 + $0x27] sm:$0xff]
    %v538 = vld [vmem:[#allocation2 + $0x2f] sm:$0xff]
    %s539 = scalar_lea.vmem [#allocation7], 128
    %v540 = vld [vmem:[%s539] sm:$0xff]
    %v541 = vld [vmem:[%s539 + $0x8] sm:$0xff]
    %v542 = vld [vmem:[%s539 + $0x10] sm:$0xff]
    %v543 = vld [vmem:[%s539 + $0x18] sm:$0xff]
    %v544 = vld [vmem:[%s539 + $0x20] sm:$0xff]
    %v545 = vld [vmem:[%s539 + $0x28] sm:$0xff]
    %v546 = vld [vmem:[%s539 + $0x30] sm:$0xff]
    %v547 = vld [vmem:[%s539 + $0x38] sm:$0xff]
    %v548 = vld [vmem:[%s539 + $0x40] sm:$0xff]
    %v549 = vld [vmem:[%s539 + $0x48] sm:$0xff]
    %v550 = vld [vmem:[%s539 + $0x50] sm:$0xff]
    %v551 = vld [vmem:[%s539 + $0x58] sm:$0xff]
    %v552 = vld [vmem:[%s539 + $0x60] sm:$0xff]
    %v553 = vld [vmem:[%s539 + $0x68] sm:$0xff]
    %v554 = vld [vmem:[%s539 + $0x70] sm:$0xff]
    %v555 = vld [vmem:[%s539 + $0x78] sm:$0xff]
    %556 = vmatprep.subr.mxu0 0.0
    %557 = vmatpush1.msra.mxu0 %v540
    %558 = vmatprep.subr.mxu0 0.0
    %559 = vmatpush1.msra.mxu0 %v541
    %560 = vmatprep.subr.mxu0 0.0
    %561 = vmatpush1.msra.mxu0 %v542
    %562 = vmatprep.subr.mxu0 0.0
    %563 = vmatpush1.msra.mxu0 %v543
    %564 = vmatprep.subr.mxu0 0.0
    %565 = vmatpush1.msra.mxu0 %v544
    %566 = vmatprep.subr.mxu0 0.0
    %567 = vmatpush1.msra.mxu0 %v545
    %568 = vmatprep.subr.mxu0 0.0
    %569 = vmatpush1.msra.mxu0 %v546
    %570 = vmatprep.subr.mxu0 0.0
    %571 = vmatpush1.msra.mxu0 %v547
    %572 = vmatprep.subr.mxu0 0.0
    %573 = vmatpush1.msra.mxu0 %v548
    %574 = vmatprep.subr.mxu0 0.0
    %575 = vmatpush1.msra.mxu0 %v549
    %576 = vmatprep.subr.mxu0 0.0
    %577 = vmatpush1.msra.mxu0 %v550
    %578 = vmatprep.subr.mxu0 0.0
    %579 = vmatpush1.msra.mxu0 %v551
    %580 = vmatprep.subr.mxu0 0.0
    %581 = vmatpush1.msra.mxu0 %v552
    %582 = vmatprep.subr.mxu0 0.0
    %583 = vmatpush1.msra.mxu0 %v553
    %584 = vmatprep.subr.mxu0 0.0
    %585 = vmatpush1.msra.mxu0 %v554
    %586 = vmatprep.subr.mxu0 0.0
    %587 = vmatpush1.msra.mxu0 %v555
    %588 = vmatprep.subr.mxu0 0.0
    %589 = vmatpush1.msra.mxu0 0.0
    %590 = vmatprep.subr.mxu0 0.0
    %591 = vmatpush1.msra.mxu0 0.0
    %592 = vmatprep.subr.mxu0 0.0
    %593 = vmatpush1.msra.mxu0 0.0
    %594 = vmatprep.subr.mxu0 0.0
    %595 = vmatpush1.msra.mxu0 0.0
    %596 = vmatprep.subr.mxu0 0.0
    %597 = vmatpush1.msra.mxu0 0.0
    %598 = vmatprep.subr.mxu0 0.0
    %599 = vmatpush1.msra.mxu0 0.0
    %600 = vmatprep.subr.mxu0 0.0
    %601 = vmatpush1.msra.mxu0 0.0
    %602 = vmatprep.subr.mxu0 0.0
    %603 = vmatpush1.msra.mxu0 0.0
    %604 = vmatprep.subr.mxu0 0.0
    %605 = vmatpush1.msra.mxu0 0.0
    %606 = vmatprep.subr.mxu0 0.0
    %607 = vmatpush1.msra.mxu0 0.0
    %608 = vmatprep.subr.mxu0 0.0
    %609 = vmatpush1.msra.mxu0 0.0
    %610 = vmatprep.subr.mxu0 0.0
    %611 = vmatpush1.msra.mxu0 0.0
    %612 = vmatprep.subr.mxu0 0.0
    %613 = vmatpush1.msra.mxu0 0.0
    %614 = vmatprep.subr.mxu0 0.0
    %615 = vmatpush1.msra.mxu0 0.0
    %616 = vmatprep.subr.mxu0 0.0
    %617 = vmatpush1.msra.mxu0 0.0
    %618 = vmatprep.subr.mxu0 0.0
    %619 = vmatpush1.msra.mxu0 0.0
    %620 = vmatprep.mubr.f32.mxu0 0.0
    %621 = vmatmul.mubr.f32.gmra.mrb[0].mxu0 %v533
    %v622 = vpop.f32.mrb[0].mxu0
    %v623 = vadd.f32 0.0, %v622
    %v624 = vpop.f32.mrb[0].mxu0
    %625 = vmatprep.mubr.f32.mxu0 0.0
    %626 = vmatmul.mubr.f32.gmra.mrb[0].mxu0 %v534
    %v627 = vpop.f32.mrb[0].mxu0
    %v628 = vadd.f32 0.0, %v627
    %v629 = vpop.f32.mrb[0].mxu0
    %630 = vmatprep.mubr.f32.mxu0 0.0
    %631 = vmatmul.mubr.f32.gmra.mrb[0].mxu0 %v535
    %v632 = vpop.f32.mrb[0].mxu0
    %v633 = vadd.f32 0.0, %v632
    %v634 = vpop.f32.mrb[0].mxu0
    %635 = vmatprep.mubr.f32.mxu0 0.0
    %636 = vmatmul.mubr.f32.gmra.mrb[0].mxu0 %v536
    %v637 = vpop.f32.mrb[0].mxu0
    %v638 = vadd.f32 0.0, %v637
    %v639 = vpop.f32.mrb[0].mxu0
    %640 = vmatprep.mubr.f32.mxu0 0.0
    %641 = vmatmul.mubr.f32.gmra.mrb[0].mxu0 %v537
    %v642 = vpop.f32.mrb[0].mxu0
    %v643 = vadd.f32 0.0, %v642
    %v644 = vpop.f32.mrb[0].mxu0
    %645 = vmatprep.mubr.f32.mxu0 0.0
    %646 = vmatmul.mubr.f32.gmra.mrb[0].mxu0 %v538
    %v647 = vpop.f32.mrb[0].mxu0
    %v648 = vadd.f32 0.0, %v647
    %v649 = vpop.f32.mrb[0].mxu0
    %650 = vdwg.mxu0
    %651 = vmatprep.subr.mxu0 0.0
    %652 = vmatpush1.msra.mxu0 %v517
    %653 = vmatprep.subr.mxu0 0.0
    %654 = vmatpush1.msra.mxu0 %v518
    %655 = vmatprep.subr.mxu0 0.0
    %656 = vmatpush1.msra.mxu0 %v519
    %657 = vmatprep.subr.mxu0 0.0
    %658 = vmatpush1.msra.mxu0 %v520
    %659 = vmatprep.subr.mxu0 0.0
    %660 = vmatpush1.msra.mxu0 %v521
    %661 = vmatprep.subr.mxu0 0.0
    %662 = vmatpush1.msra.mxu0 %v522
    %663 = vmatprep.subr.mxu0 0.0
    %664 = vmatpush1.msra.mxu0 %v523
    %665 = vmatprep.subr.mxu0 0.0
    %666 = vmatpush1.msra.mxu0 %v524
    %667 = vmatprep.subr.mxu0 0.0
    %668 = vmatpush1.msra.mxu0 %v525
    %669 = vmatprep.subr.mxu0 0.0
    %670 = vmatpush1.msra.mxu0 %v526
    %671 = vmatprep.subr.mxu0 0.0
    %672 = vmatpush1.msra.mxu0 %v527
    %673 = vmatprep.subr.mxu0 0.0
    %674 = vmatpush1.msra.mxu0 %v528
    %675 = vmatprep.subr.mxu0 0.0
    %676 = vmatpush1.msra.mxu0 %v529
    %677 = vmatprep.subr.mxu0 0.0
    %678 = vmatpush1.msra.mxu0 %v530
    %679 = vmatprep.subr.mxu0 0.0
    %680 = vmatpush1.msra.mxu0 %v531
    %681 = vmatprep.subr.mxu0 0.0
    %682 = vmatpush1.msra.mxu0 %v532
    %683 = vmatprep.subr.mxu0 0.0
    %684 = vmatpush1.msra.mxu0 0.0
    %685 = vmatprep.subr.mxu0 0.0
    %686 = vmatpush1.msra.mxu0 0.0
    %687 = vmatprep.subr.mxu0 0.0
    %688 = vmatpush1.msra.mxu0 0.0
    %689 = vmatprep.subr.mxu0 0.0
    %690 = vmatpush1.msra.mxu0 0.0
    %691 = vmatprep.subr.mxu0 0.0
    %692 = vmatpush1.msra.mxu0 0.0
    %693 = vmatprep.subr.mxu0 0.0
    %694 = vmatpush1.msra.mxu0 0.0
    %695 = vmatprep.subr.mxu0 0.0
    %696 = vmatpush1.msra.mxu0 0.0
    %697 = vmatprep.subr.mxu0 0.0
    %698 = vmatpush1.msra.mxu0 0.0
    %699 = vmatprep.subr.mxu0 0.0
    %700 = vmatpush1.msra.mxu0 0.0
    %701 = vmatprep.subr.mxu0 0.0
    %702 = vmatpush1.msra.mxu0 0.0
    %703 = vmatprep.subr.mxu0 0.0
    %704 = vmatpush1.msra.mxu0 0.0
    %705 = vmatprep.subr.mxu0 0.0
    %706 = vmatpush1.msra.mxu0 0.0
    %707 = vmatprep.subr.mxu0 0.0
    %708 = vmatpush1.msra.mxu0 0.0
    %709 = vmatprep.subr.mxu0 0.0
    %710 = vmatpush1.msra.mxu0 0.0
    %711 = vmatprep.subr.mxu0 0.0
    %712 = vmatpush1.msra.mxu0 0.0
    %713 = vmatprep.subr.mxu0 0.0
    %714 = vmatpush1.msra.mxu0 0.0
    %715 = vmatprep.mubr.f32.mxu0 0.0
    %716 = vmatmul.mubr.f32.gmra.mrb[0].mxu0 %v511
    %v717 = vpop.f32.mrb[0].mxu0
    %v718 = vadd.f32 %v623, %v717
    %v719 = vpop.f32.mrb[0].mxu0
    %720 = vmatprep.mubr.f32.mxu0 0.0
    %721 = vmatmul.mubr.f32.gmra.mrb[0].mxu0 %v512
    %v722 = vpop.f32.mrb[0].mxu0
    %v723 = vadd.f32 %v628, %v722
    %v724 = vpop.f32.mrb[0].mxu0
    %725 = vmatprep.mubr.f32.mxu0 0.0
    %726 = vmatmul.mubr.f32.gmra.mrb[0].mxu0 %v513
    %v727 = vpop.f32.mrb[0].mxu0
    %v728 = vadd.f32 %v633, %v727
    %v729 = vpop.f32.mrb[0].mxu0
    %730 = vmatprep.mubr.f32.mxu0 0.0
    %731 = vmatmul.mubr.f32.gmra.mrb[0].mxu0 %v514
    %v732 = vpop.f32.mrb[0].mxu0
    %v733 = vadd.f32 %v638, %v732
    %v734 = vpop.f32.mrb[0].mxu0
    %735 = vmatprep.mubr.f32.mxu0 0.0
    %736 = vmatmul.mubr.f32.gmra.mrb[0].mxu0 %v515
    %v737 = vpop.f32.mrb[0].mxu0
    %v738 = vadd.f32 %v643, %v737
    %v739 = vpop.f32.mrb[0].mxu0
    %740 = vmatprep.mubr.f32.mxu0 0.0
    %741 = vmatmul.mubr.f32.gmra.mrb[0].mxu0 %v516
    %v742 = vpop.f32.mrb[0].mxu0
    %v743 = vadd.f32 %v648, %v742
    %v744 = vpop.f32.mrb[0].mxu0
    %745 = vdwg.mxu0
    %v746 = vld [vmem:[#allocation2 + $0x8] sm:$0xff]
    %v747 = vld [vmem:[#allocation2 + $0x10] sm:$0xff]
    %v748 = vld [vmem:[#allocation2 + $0x18] sm:$0xff]
    %v749 = vld [vmem:[#allocation2 + $0x20] sm:$0xff]
    %v750 = vld [vmem:[#allocation2 + $0x28] sm:$0xff]
    %v751 = vld [vmem:[#allocation2 + $0x30] sm:$0xff]
    %s752 = scalar_lea.vmem [#allocation7], 256
    %v753 = vld [vmem:[%s752] sm:$0xff]
    %v754 = vld [vmem:[%s752 + $0x8] sm:$0xff]
    %v755 = vld [vmem:[%s752 + $0x10] sm:$0xff]
    %v756 = vld [vmem:[%s752 + $0x18] sm:$0xff]
    %v757 = vld [vmem:[%s752 + $0x20] sm:$0xff]
    %v758 = vld [vmem:[%s752 + $0x28] sm:$0xff]
    %v759 = vld [vmem:[%s752 + $0x30] sm:$0xff]
    %v760 = vld [vmem:[%s752 + $0x38] sm:$0xff]
    %v761 = vld [vmem:[%s752 + $0x40] sm:$0xff]
    %v762 = vld [vmem:[%s752 + $0x48] sm:$0xff]
    %v763 = vld [vmem:[%s752 + $0x50] sm:$0xff]
    %v764 = vld [vmem:[%s752 + $0x58] sm:$0xff]
    %v765 = vld [vmem:[%s752 + $0x60] sm:$0xff]
    %v766 = vld [vmem:[%s752 + $0x68] sm:$0xff]
    %v767 = vld [vmem:[%s752 + $0x70] sm:$0xff]
    %v768 = vld [vmem:[%s752 + $0x78] sm:$0xff]
    %769 = vmatprep.subr.mxu0 0.0
    %770 = vmatpush1.msra.mxu0 %v753
    %771 = vmatprep.subr.mxu0 0.0
    %772 = vmatpush1.msra.mxu0 %v754
    %773 = vmatprep.subr.mxu0 0.0
    %774 = vmatpush1.msra.mxu0 %v755
    %775 = vmatprep.subr.mxu0 0.0
    %776 = vmatpush1.msra.mxu0 %v756
    %777 = vmatprep.subr.mxu0 0.0
    %778 = vmatpush1.msra.mxu0 %v757
    %779 = vmatprep.subr.mxu0 0.0
    %780 = vmatpush1.msra.mxu0 %v758
    %781 = vmatprep.subr.mxu0 0.0
    %782 = vmatpush1.msra.mxu0 %v759
    %783 = vmatprep.subr.mxu0 0.0
    %784 = vmatpush1.msra.mxu0 %v760
    %785 = vmatprep.subr.mxu0 0.0
    %786 = vmatpush1.msra.mxu0 %v761
    %787 = vmatprep.subr.mxu0 0.0
    %788 = vmatpush1.msra.mxu0 %v762
    %789 = vmatprep.subr.mxu0 0.0
    %790 = vmatpush1.msra.mxu0 %v763
    %791 = vmatprep.subr.mxu0 0.0
    %792 = vmatpush1.msra.mxu0 %v764
    %793 = vmatprep.subr.mxu0 0.0
    %794 = vmatpush1.msra.mxu0 %v765
    %795 = vmatprep.subr.mxu0 0.0
    %796 = vmatpush1.msra.mxu0 %v766
    %797 = vmatprep.subr.mxu0 0.0
    %798 = vmatpush1.msra.mxu0 %v767
    %799 = vmatprep.subr.mxu0 0.0
    %800 = vmatpush1.msra.mxu0 %v768
    %801 = vmatprep.subr.mxu0 0.0
    %802 = vmatpush1.msra.mxu0 0.0
    %803 = vmatprep.subr.mxu0 0.0
    %804 = vmatpush1.msra.mxu0 0.0
    %805 = vmatprep.subr.mxu0 0.0
    %806 = vmatpush1.msra.mxu0 0.0
    %807 = vmatprep.subr.mxu0 0.0
    %808 = vmatpush1.msra.mxu0 0.0
    %809 = vmatprep.subr.mxu0 0.0
    %810 = vmatpush1.msra.mxu0 0.0
    %811 = vmatprep.subr.mxu0 0.0
    %812 = vmatpush1.msra.mxu0 0.0
    %813 = vmatprep.subr.mxu0 0.0
    %814 = vmatpush1.msra.mxu0 0.0
    %815 = vmatprep.subr.mxu0 0.0
    %816 = vmatpush1.msra.mxu0 0.0
    %817 = vmatprep.subr.mxu0 0.0
    %818 = vmatpush1.msra.mxu0 0.0
    %819 = vmatprep.subr.mxu0 0.0
    %820 = vmatpush1.msra.mxu0 0.0
    %821 = vmatprep.subr.mxu0 0.0
    %822 = vmatpush1.msra.mxu0 0.0
    %823 = vmatprep.subr.mxu0 0.0
    %824 = vmatpush1.msra.mxu0 0.0
    %825 = vmatprep.subr.mxu0 0.0
    %826 = vmatpush1.msra.mxu0 0.0
    %827 = vmatprep.subr.mxu0 0.0
    %828 = vmatpush1.msra.mxu0 0.0
    %829 = vmatprep.subr.mxu0 0.0
    %830 = vmatpush1.msra.mxu0 0.0
    %831 = vmatprep.subr.mxu0 0.0
    %832 = vmatpush1.msra.mxu0 0.0
    %833 = vmatprep.mubr.f32.mxu0 0.0
    %834 = vmatmul.mubr.f32.gmra.mrb[0].mxu0 %v746
    %v835 = vpop.f32.mrb[0].mxu0
    %v836 = vadd.f32 0.0, %v835
    %v837 = vpop.f32.mrb[0].mxu0
    %838 = vmatprep.mubr.f32.mxu0 0.0
    %839 = vmatmul.mubr.f32.gmra.mrb[0].mxu0 %v747
    %v840 = vpop.f32.mrb[0].mxu0
    %v841 = vadd.f32 0.0, %v840
    %v842 = vpop.f32.mrb[0].mxu0
    %843 = vmatprep.mubr.f32.mxu0 0.0
    %844 = vmatmul.mubr.f32.gmra.mrb[0].mxu0 %v748
    %v845 = vpop.f32.mrb[0].mxu0
    %v846 = vadd.f32 0.0, %v845
    %v847 = vpop.f32.mrb[0].mxu0
    %848 = vmatprep.mubr.f32.mxu0 0.0
    %849 = vmatmul.mubr.f32.gmra.mrb[0].mxu0 %v749
    %v850 = vpop.f32.mrb[0].mxu0
    %v851 = vadd.f32 0.0, %v850
    %v852 = vpop.f32.mrb[0].mxu0
    %853 = vmatprep.mubr.f32.mxu0 0.0
    %854 = vmatmul.mubr.f32.gmra.mrb[0].mxu0 %v750
    %v855 = vpop.f32.mrb[0].mxu0
    %v856 = vadd.f32 0.0, %v855
    %v857 = vpop.f32.mrb[0].mxu0
    %858 = vmatprep.mubr.f32.mxu0 0.0
    %859 = vmatmul.mubr.f32.gmra.mrb[0].mxu0 %v751
    %v860 = vpop.f32.mrb[0].mxu0
    %v861 = vadd.f32 0.0, %v860
    %v862 = vpop.f32.mrb[0].mxu0
    %863 = vdwg.mxu0
    %v864 = vadd.f32 %v718, %v836
    %v865 = vadd.f32 %v723, %v841
    %v866 = vadd.f32 %v728, %v846
    %v867 = vadd.f32 %v733, %v851
    %v868 = vadd.f32 %v738, %v856
    %v869 = vadd.f32 %v743, %v861
    %v870 = vld [vmem:[%s3] sm:$0x1]
    %v871 = vld [vmem:[%s3 + $0x1] sm:$0x1]
    %v872 = vmul.f32 %v864, %v505
    %v873 = vmul.f32 %v865, %v506
    %v874 = vmul.f32 %v866, %v507
    %v875 = vmul.f32 %v867, %v508
    %v876 = vmul.f32 %v868, %v509
    %v877 = vmul.f32 %v869, %v510
    %v878 = vadd.f32 %v872, %v873
    %v879 = vadd.f32 %v878, %v874
    %v880 = vadd.f32 %v879, %v875
    %v881 = vadd.f32 %v880, %v876
    %v882 = vadd.f32 %v881, %v877
    %v883 = vrot.slane %v882, 4
    %v884 = vadd.f32 %v882, %v883
    %v885 = vrot.slane %v884, 2
    %v886 = vadd.f32 %v884, %v885
    %v887 = vrot.slane %v886, 1
    %v888 = vadd.f32 %v886, %v887
    %v889 = vmul.f32 %v872, %v864
    %v890 = vmul.f32 %v873, %v865
    %v891 = vmul.f32 %v874, %v866
    %v892 = vmul.f32 %v875, %v867
    %v893 = vmul.f32 %v876, %v868
    %v894 = vmul.f32 %v877, %v869
    %v895 = vadd.f32 %v889, %v890
    %v896 = vadd.f32 %v895, %v891
    %v897 = vadd.f32 %v896, %v892
    %v898 = vadd.f32 %v897, %v893
    %v899 = vadd.f32 %v898, %v894
    %v900 = vrot.slane %v899, 4
    %v901 = vadd.f32 %v899, %v900
    %v902 = vrot.slane %v901, 2
    %v903 = vadd.f32 %v901, %v902
    %v904 = vrot.slane %v903, 1
    %v905 = vadd.f32 %v903, %v904
    %vm906 = vcmask 1040384
    %v907 = vsel %vm906, %v888, %v905
    %908 = vmatprep.subr.mxu0 0.0
    %909 = vmatpush1.msra.mxu0 %v352
    %910 = vmatprep.subr.mxu0 0.0
    %911 = vmatpush1.msra.mxu0 %v353
    %912 = vmatprep.subr.mxu0 0.0
    %913 = vmatpush1.msra.mxu0 %v354
    %914 = vmatprep.subr.mxu0 0.0
    %915 = vmatpush1.msra.mxu0 %v355
    %916 = vmatprep.subr.mxu0 0.0
    %917 = vmatpush1.msra.mxu0 %v356
    %918 = vmatprep.subr.mxu0 0.0
    %919 = vmatpush1.msra.mxu0 %v357
    %920 = vmatprep.subr.mxu0 0.0
    %921 = vmatpush1.msra.mxu0 %v358
    %922 = vmatprep.subr.mxu0 0.0
    %923 = vmatpush1.msra.mxu0 %v359
    %924 = vmatprep.subr.mxu0 0.0
    %925 = vmatpush1.msra.mxu0 %v360
    %926 = vmatprep.subr.mxu0 0.0
    %927 = vmatpush1.msra.mxu0 %v361
    %928 = vmatprep.subr.mxu0 0.0
    %929 = vmatpush1.msra.mxu0 %v362
    %930 = vmatprep.subr.mxu0 0.0
    %931 = vmatpush1.msra.mxu0 %v363
    %932 = vmatprep.subr.mxu0 0.0
    %933 = vmatpush1.msra.mxu0 %v364
    %934 = vmatprep.subr.mxu0 0.0
    %935 = vmatpush1.msra.mxu0 %v365
    %936 = vmatprep.subr.mxu0 0.0
    %937 = vmatpush1.msra.mxu0 %v366
    %938 = vmatprep.subr.mxu0 0.0
    %939 = vmatpush1.msra.mxu0 %v367
    %940 = vmatprep.subr.mxu0 0.0
    %941 = vmatpush1.msra.mxu0 0.0
    %942 = vmatprep.subr.mxu0 0.0
    %943 = vmatpush1.msra.mxu0 0.0
    %944 = vmatprep.subr.mxu0 0.0
    %945 = vmatpush1.msra.mxu0 0.0
    %946 = vmatprep.subr.mxu0 0.0
    %947 = vmatpush1.msra.mxu0 0.0
    %948 = vmatprep.subr.mxu0 0.0
    %949 = vmatpush1.msra.mxu0 0.0
    %950 = vmatprep.subr.mxu0 0.0
    %951 = vmatpush1.msra.mxu0 0.0
    %952 = vmatprep.subr.mxu0 0.0
    %953 = vmatpush1.msra.mxu0 0.0
    %954 = vmatprep.subr.mxu0 0.0
    %955 = vmatpush1.msra.mxu0 0.0
    %956 = vmatprep.subr.mxu0 0.0
    %957 = vmatpush1.msra.mxu0 0.0
    %958 = vmatprep.subr.mxu0 0.0
    %959 = vmatpush1.msra.mxu0 0.0
    %960 = vmatprep.subr.mxu0 0.0
    %961 = vmatpush1.msra.mxu0 0.0
    %962 = vmatprep.subr.mxu0 0.0
    %963 = vmatpush1.msra.mxu0 0.0
    %964 = vmatprep.subr.mxu0 0.0
    %965 = vmatpush1.msra.mxu0 0.0
    %966 = vmatprep.subr.mxu0 0.0
    %967 = vmatpush1.msra.mxu0 0.0
    %968 = vmatprep.subr.mxu0 0.0
    %969 = vmatpush1.msra.mxu0 0.0
    %970 = vmatprep.subr.mxu0 0.0
    %971 = vmatpush1.msra.mxu0 0.0
    %972 = vmatprep.mubr.f32.mxu0 0.0
    %973 = vmatmul.mubr.f32.gmra.mrb[0].mxu0 %v907
    %v974 = vpop.f32.mrb[0].mxu0
    %v975 = vadd.f32 0.0, %v974
    %v976 = vpop.f32.mrb[0].mxu0
    %977 = vdwg.mxu0
    %v978 = vmul.f32 %v975, 0.001953125
    %v979 = vmul.f32 %v978, %v978
    %v981 = vrot.slane %v979, 7
    %v983 = vsub.f32 %v978, %v981
    %v984 = vadd.f32 %v983, 1e-05
    %v985 = vrsqrt.pop %v984
    %v987 = vrot.slane %v985, 1
    %v989 = vmul.f32 %v870, %v987
    %v990 = vmul.f32 %v978, %v989
    %v991 = vsub.f32 %v871, %v990
    %v993 = vrot.slane %v991, 7
    %v995 = vsel %vm906, %v989, %v993
    %vm996 = vcmask 31744
    %v998 = vsel %vm996, %v995, 0
    %vm1000 = vcmask 1043456
    %v1002 = vsel %vm1000, %v384, 0
    %1004 = vmatprep.subr.mxu0 0.0
    %1005 = vmatpush1.msra.mxu0 %v1002
    %1006 = vmatprep.subr.mxu0 0.0
    %1007 = vmatpush1.msra.mxu0 0.0
    %1008 = vmatprep.subr.mxu0 0.0
    %1009 = vmatpush1.msra.mxu0 0.0
    %1010 = vmatprep.subr.mxu0 0.0
    %1011 = vmatpush1.msra.mxu0 0.0
    %1012 = vmatprep.subr.mxu0 0.0
    %1013 = vmatpush1.msra.mxu0 0.0
    %1014 = vmatprep.subr.mxu0 0.0
    %1015 = vmatpush1.msra.mxu0 0.0
    %1016 = vmatprep.subr.mxu0 0.0
    %1017 = vmatpush1.msra.mxu0 0.0
    %1018 = vmatprep.subr.mxu0 0.0
    %1019 = vmatpush1.msra.mxu0 0.0
    %1020 = vmatprep.subr.mxu0 0.0
    %1021 = vmatpush1.msra.mxu0 0.0
    %1022 = vmatprep.subr.mxu0 0.0
    %1023 = vmatpush1.msra.mxu0 0.0
    %1024 = vmatprep.subr.mxu0 0.0
    %1025 = vmatpush1.msra.mxu0 0.0
    %1026 = vmatprep.subr.mxu0 0.0
    %1027 = vmatpush1.msra.mxu0 0.0
    %1028 = vmatprep.subr.mxu0 0.0
    %1029 = vmatpush1.msra.mxu0 0.0
    %1030 = vmatprep.subr.mxu0 0.0
    %1031 = vmatpush1.msra.mxu0 0.0
    %1032 = vmatprep.subr.mxu0 0.0
    %1033 = vmatpush1.msra.mxu0 0.0
    %1034 = vmatprep.subr.mxu0 0.0
    %1035 = vmatpush1.msra.mxu0 0.0
    %1036 = vmatprep.subr.mxu0 0.0
    %1037 = vmatpush1.msra.mxu0 0.0
    %1038 = vmatprep.subr.mxu0 0.0
    %1039 = vmatpush1.msra.mxu0 0.0
    %1040 = vmatprep.subr.mxu0 0.0
    %1041 = vmatpush1.msra.mxu0 0.0
    %1042 = vmatprep.subr.mxu0 0.0
    %1043 = vmatpush1.msra.mxu0 0.0
    %1044 = vmatprep.subr.mxu0 0.0
    %1045 = vmatpush1.msra.mxu0 0.0
    %1046 = vmatprep.subr.mxu0 0.0
    %1047 = vmatpush1.msra.mxu0 0.0
    %1048 = vmatprep.subr.mxu0 0.0
    %1049 = vmatpush1.msra.mxu0 0.0
    %1050 = vmatprep.subr.mxu0 0.0
    %1051 = vmatpush1.msra.mxu0 0.0
    %1052 = vmatprep.subr.mxu0 0.0
    %1053 = vmatpush1.msra.mxu0 0.0
    %1054 = vmatprep.subr.mxu0 0.0
    %1055 = vmatpush1.msra.mxu0 0.0
    %1056 = vmatprep.subr.mxu0 0.0
    %1057 = vmatpush1.msra.mxu0 0.0
    %1058 = vmatprep.subr.mxu0 0.0
    %1059 = vmatpush1.msra.mxu0 0.0
    %1060 = vmatprep.subr.mxu0 0.0
    %1061 = vmatpush1.msra.mxu0 0.0
    %1062 = vmatprep.subr.mxu0 0.0
    %1063 = vmatpush1.msra.mxu0 0.0
    %1064 = vmatprep.subr.mxu0 0.0
    %1065 = vmatpush1.msra.mxu0 0.0
    %1066 = vmatprep.subr.mxu0 0.0
    %1067 = vmatpush1.msra.mxu0 0.0
    %1068 = vmatprep.mubr.f32.mxu0 0.0
    %1069 = vmatmul.mubr.f32.gmra.mrb[0].mxu0 %v998
    %v1070 = vpop.f32.mrb[0].mxu0
    %v1071 = vadd.f32 0.0, %v1070
    %v1072 = vpop.f32.mrb[0].mxu0
    %1073 = vdwg.mxu0
    %v1074 = vlaneseq
    %v1075 = vshrl.u32 %v1074, 7
    %v1076 = vsub.s32 0, %v1075
    %v1077 = vrot.slane %v1071, %v1076
    %v1078 = vmul.f32 %v864, %v1077
    %v1079 = vmul.f32 %v865, %v1077
    %v1080 = vmul.f32 %v866, %v1077
    %v1081 = vmul.f32 %v867, %v1077
    %v1082 = vmul.f32 %v868, %v1077
    %v1083 = vmul.f32 %v869, %v1077
    %v1084 = vlaneseq
    %v1085 = vshrl.u32 %v1084, 7
    %v1086 = vsub.s32 1, %v1085
    %v1087 = vrot.slane %v1071, %v1086
    %v1088 = vadd.f32 %v1078, %v1087
    %v1089 = vadd.f32 %v1079, %v1087
    %v1090 = vadd.f32 %v1080, %v1087
    %v1091 = vadd.f32 %v1081, %v1087
    %v1092 = vadd.f32 %v1082, %v1087
    %v1093 = vadd.f32 %v1083, %v1087
    %v1094 = vmax.f32 %v1088, 0.0
    %v1095 = vmax.f32 %v1089, 0.0
    %v1096 = vmax.f32 %v1090, 0.0
    %v1097 = vmax.f32 %v1091, 0.0
    %v1098 = vmax.f32 %v1092, 0.0
    %v1099 = vmax.f32 %v1093, 0.0
    %v1100 = vmul.f32 %v1094, %v505
    %v1101 = vmul.f32 %v1095, %v506
    %v1102 = vmul.f32 %v1096, %v507
    %v1103 = vmul.f32 %v1097, %v508
    %v1104 = vmul.f32 %v1098, %v509
    %v1105 = vmul.f32 %v1099, %v510
    %1106 = vst [vmem:[#allocation3 + $0x7] sm:$0xff] %v1100
    %1107 = vst [vmem:[#allocation3 + $0xf] sm:$0xff] %v1101
    %1108 = vst [vmem:[#allocation3 + $0x17] sm:$0xff] %v1102
    %1109 = vst [vmem:[#allocation3 + $0x1f] sm:$0xff] %v1103
    %1110 = vst [vmem:[#allocation3 + $0x27] sm:$0xff] %v1104
    %1111 = vst [vmem:[#allocation3 + $0x2f] sm:$0xff] %v1105
    %v1112 = vld [vmem:[#allocation3 + $0x6] sm:$0xff]
    %v1113 = vld [vmem:[#allocation3 + $0xe] sm:$0xff]
    %v1114 = vld [vmem:[#allocation3 + $0x16] sm:$0xff]
    %v1115 = vld [vmem:[#allocation3 + $0x1e] sm:$0xff]
    %v1116 = vld [vmem:[#allocation3 + $0x26] sm:$0xff]
    %v1117 = vld [vmem:[#allocation3 + $0x2e] sm:$0xff]
    %v1118 = vld [vmem:[#allocation9] sm:$0xff]
    %v1119 = vld [vmem:[#allocation9 + $0x8] sm:$0xff]
    %v1120 = vld [vmem:[#allocation9 + $0x10] sm:$0xff]
    %v1121 = vld [vmem:[#allocation9 + $0x18] sm:$0xff]
    %v1122 = vld [vmem:[#allocation9 + $0x20] sm:$0xff]
    %v1123 = vld [vmem:[#allocation9 + $0x28] sm:$0xff]
    %v1124 = vld [vmem:[#allocation9 + $0x30] sm:$0xff]
    %v1125 = vld [vmem:[#allocation9 + $0x38] sm:$0xff]
    %v1126 = vld [vmem:[#allocation9 + $0x40] sm:$0xff]
    %v1127 = vld [vmem:[#allocation9 + $0x48] sm:$0xff]
    %v1128 = vld [vmem:[#allocation9 + $0x50] sm:$0xff]
    %v1129 = vld [vmem:[#allocation9 + $0x58] sm:$0xff]
    %v1130 = vld [vmem:[#allocation9 + $0x60] sm:$0xff]
    %v1131 = vld [vmem:[#allocation9 + $0x68] sm:$0xff]
    %v1132 = vld [vmem:[#allocation9 + $0x70] sm:$0xff]
    %v1133 = vld [vmem:[#allocation9 + $0x78] sm:$0xff]
    %v1134 = vld [vmem:[#allocation3 + $0x7] sm:$0xff]
    %v1135 = vld [vmem:[#allocation3 + $0xf] sm:$0xff]
    %v1136 = vld [vmem:[#allocation3 + $0x17] sm:$0xff]
    %v1137 = vld [vmem:[#allocation3 + $0x1f] sm:$0xff]
    %v1138 = vld [vmem:[#allocation3 + $0x27] sm:$0xff]
    %v1139 = vld [vmem:[#allocation3 + $0x2f] sm:$0xff]
    %s1140 = scalar_lea.vmem [#allocation9], 128
    %v1141 = vld [vmem:[%s1140] sm:$0xff]
    %v1142 = vld [vmem:[%s1140 + $0x8] sm:$0xff]
    %v1143 = vld [vmem:[%s1140 + $0x10] sm:$0xff]
    %v1144 = vld [vmem:[%s1140 + $0x18] sm:$0xff]
    %v1145 = vld [vmem:[%s1140 + $0x20] sm:$0xff]
    %v1146 = vld [vmem:[%s1140 + $0x28] sm:$0xff]
    %v1147 = vld [vmem:[%s1140 + $0x30] sm:$0xff]
    %v1148 = vld [vmem:[%s1140 + $0x38] sm:$0xff]
    %v1149 = vld [vmem:[%s1140 + $0x40] sm:$0xff]
    %v1150 = vld [vmem:[%s1140 + $0x48] sm:$0xff]
    %v1151 = vld [vmem:[%s1140 + $0x50] sm:$0xff]
    %v1152 = vld [vmem:[%s1140 + $0x58] sm:$0xff]
    %v1153 = vld [vmem:[%s1140 + $0x60] sm:$0xff]
    %v1154 = vld [vmem:[%s1140 + $0x68] sm:$0xff]
    %v1155 = vld [vmem:[%s1140 + $0x70] sm:$0xff]
    %v1156 = vld [vmem:[%s1140 + $0x78] sm:$0xff]
    %1157 = vmatprep.subr.mxu0 0.0
    %1158 = vmatpush1.msra.mxu0 %v1141
    %1159 = vmatprep.subr.mxu0 0.0
    %1160 = vmatpush1.msra.mxu0 %v1142
    %1161 = vmatprep.subr.mxu0 0.0
    %1162 = vmatpush1.msra.mxu0 %v1143
    %1163 = vmatprep.subr.mxu0 0.0
    %1164 = vmatpush1.msra.mxu0 %v1144
    %1165 = vmatprep.subr.mxu0 0.0
    %1166 = vmatpush1.msra.mxu0 %v1145
    %1167 = vmatprep.subr.mxu0 0.0
    %1168 = vmatpush1.msra.mxu0 %v1146
    %1169 = vmatprep.subr.mxu0 0.0
    %1170 = vmatpush1.msra.mxu0 %v1147
    %1171 = vmatprep.subr.mxu0 0.0
    %1172 = vmatpush1.msra.mxu0 %v1148
    %1173 = vmatprep.subr.mxu0 0.0
    %1174 = vmatpush1.msra.mxu0 %v1149
    %1175 = vmatprep.subr.mxu0 0.0
    %1176 = vmatpush1.msra.mxu0 %v1150
    %1177 = vmatprep.subr.mxu0 0.0
    %1178 = vmatpush1.msra.mxu0 %v1151
    %1179 = vmatprep.subr.mxu0 0.0
    %1180 = vmatpush1.msra.mxu0 %v1152
    %1181 = vmatprep.subr.mxu0 0.0
    %1182 = vmatpush1.msra.mxu0 %v1153
    %1183 = vmatprep.subr.mxu0 0.0
    %1184 = vmatpush1.msra.mxu0 %v1154
    %1185 = vmatprep.subr.mxu0 0.0
    %1186 = vmatpush1.msra.mxu0 %v1155
    %1187 = vmatprep.subr.mxu0 0.0
    %1188 = vmatpush1.msra.mxu0 %v1156
    %1189 = vmatprep.subr.mxu0 0.0
    %1190 = vmatpush1.msra.mxu0 0.0
    %1191 = vmatprep.subr.mxu0 0.0
    %1192 = vmatpush1.msra.mxu0 0.0
    %1193 = vmatprep.subr.mxu0 0.0
    %1194 = vmatpush1.msra.mxu0 0.0
    %1195 = vmatprep.subr.mxu0 0.0
    %1196 = vmatpush1.msra.mxu0 0.0
    %1197 = vmatprep.subr.mxu0 0.0
    %1198 = vmatpush1.msra.mxu0 0.0
    %1199 = vmatprep.subr.mxu0 0.0
    %1200 = vmatpush1.msra.mxu0 0.0
    %1201 = vmatprep.subr.mxu0 0.0
    %1202 = vmatpush1.msra.mxu0 0.0
    %1203 = vmatprep.subr.mxu0 0.0
    %1204 = vmatpush1.msra.mxu0 0.0
    %1205 = vmatprep.subr.mxu0 0.0
    %1206 = vmatpush1.msra.mxu0 0.0
    %1207 = vmatprep.subr.mxu0 0.0
    %1208 = vmatpush1.msra.mxu0 0.0
    %1209 = vmatprep.subr.mxu0 0.0
    %1210 = vmatpush1.msra.mxu0 0.0
    %1211 = vmatprep.subr.mxu0 0.0
    %1212 = vmatpush1.msra.mxu0 0.0
    %1213 = vmatprep.subr.mxu0 0.0
    %1214 = vmatpush1.msra.mxu0 0.0
    %1215 = vmatprep.subr.mxu0 0.0
    %1216 = vmatpush1.msra.mxu0 0.0
    %1217 = vmatprep.subr.mxu0 0.0
    %1218 = vmatpush1.msra.mxu0 0.0
    %1219 = vmatprep.subr.mxu0 0.0
    %1220 = vmatpush1.msra.mxu0 0.0
    %1221 = vmatprep.mubr.f32.mxu0 0.0
    %1222 = vmatmul.mubr.f32.gmra.mrb[0].mxu0 %v1134
    %v1223 = vpop.f32.mrb[0].mxu0
    %v1224 = vadd.f32 0.0, %v1223
    %v1225 = vpop.f32.mrb[0].mxu0
    %1226 = vmatprep.mubr.f32.mxu0 0.0
    %1227 = vmatmul.mubr.f32.gmra.mrb[0].mxu0 %v1135
    %v1228 = vpop.f32.mrb[0].mxu0
    %v1229 = vadd.f32 0.0, %v1228
    %v1230 = vpop.f32.mrb[0].mxu0
    %1231 = vmatprep.mubr.f32.mxu0 0.0
    %1232 = vmatmul.mubr.f32.gmra.mrb[0].mxu0 %v1136
    %v1233 = vpop.f32.mrb[0].mxu0
    %v1234 = vadd.f32 0.0, %v1233
    %v1235 = vpop.f32.mrb[0].mxu0
    %1236 = vmatprep.mubr.f32.mxu0 0.0
    %1237 = vmatmul.mubr.f32.gmra.mrb[0].mxu0 %v1137
    %v1238 = vpop.f32.mrb[0].mxu0
    %v1239 = vadd.f32 0.0, %v1238
    %v1240 = vpop.f32.mrb[0].mxu0
    %1241 = vmatprep.mubr.f32.mxu0 0.0
    %1242 = vmatmul.mubr.f32.gmra.mrb[0].mxu0 %v1138
    %v1243 = vpop.f32.mrb[0].mxu0
    %v1244 = vadd.f32 0.0, %v1243
    %v1245 = vpop.f32.mrb[0].mxu0
    %1246 = vmatprep.mubr.f32.mxu0 0.0
    %1247 = vmatmul.mubr.f32.gmra.mrb[0].mxu0 %v1139
    %v1248 = vpop.f32.mrb[0].mxu0
    %v1249 = vadd.f32 0.0, %v1248
    %v1250 = vpop.f32.mrb[0].mxu0
    %1251 = vdwg.mxu0
    %1252 = vmatprep.subr.mxu0 0.0
    %1253 = vmatpush1.msra.mxu0 %v1118
    %1254 = vmatprep.subr.mxu0 0.0
    %1255 = vmatpush1.msra.mxu0 %v1119
    %1256 = vmatprep.subr.mxu0 0.0
    %1257 = vmatpush1.msra.mxu0 %v1120
    %1258 = vmatprep.subr.mxu0 0.0
    %1259 = vmatpush1.msra.mxu0 %v1121
    %1260 = vmatprep.subr.mxu0 0.0
    %1261 = vmatpush1.msra.mxu0 %v1122
    %1262 = vmatprep.subr.mxu0 0.0
    %1263 = vmatpush1.msra.mxu0 %v1123
    %1264 = vmatprep.subr.mxu0 0.0
    %1265 = vmatpush1.msra.mxu0 %v1124
    %1266 = vmatprep.subr.mxu0 0.0
    %1267 = vmatpush1.msra.mxu0 %v1125
    %1268 = vmatprep.subr.mxu0 0.0
    %1269 = vmatpush1.msra.mxu0 %v1126
    %1270 = vmatprep.subr.mxu0 0.0
    %1271 = vmatpush1.msra.mxu0 %v1127
    %1272 = vmatprep.subr.mxu0 0.0
    %1273 = vmatpush1.msra.mxu0 %v1128
    %1274 = vmatprep.subr.mxu0 0.0
    %1275 = vmatpush1.msra.mxu0 %v1129
    %1276 = vmatprep.subr.mxu0 0.0
    %1277 = vmatpush1.msra.mxu0 %v1130
    %1278 = vmatprep.subr.mxu0 0.0
    %1279 = vmatpush1.msra.mxu0 %v1131
    %1280 = vmatprep.subr.mxu0 0.0
    %1281 = vmatpush1.msra.mxu0 %v1132
    %1282 = vmatprep.subr.mxu0 0.0
    %1283 = vmatpush1.msra.mxu0 %v1133
    %1284 = vmatprep.subr.mxu0 0.0
    %1285 = vmatpush1.msra.mxu0 0.0
    %1286 = vmatprep.subr.mxu0 0.0
    %1287 = vmatpush1.msra.mxu0 0.0
    %1288 = vmatprep.subr.mxu0 0.0
    %1289 = vmatpush1.msra.mxu0 0.0
    %1290 = vmatprep.subr.mxu0 0.0
    %1291 = vmatpush1.msra.mxu0 0.0
    %1292 = vmatprep.subr.mxu0 0.0
    %1293 = vmatpush1.msra.mxu0 0.0
    %1294 = vmatprep.subr.mxu0 0.0
    %1295 = vmatpush1.msra.mxu0 0.0
    %1296 = vmatprep.subr.mxu0 0.0
    %1297 = vmatpush1.msra.mxu0 0.0
    %1298 = vmatprep.subr.mxu0 0.0
    %1299 = vmatpush1.msra.mxu0 0.0
    %1300 = vmatprep.subr.mxu0 0.0
    %1301 = vmatpush1.msra.mxu0 0.0
    %1302 = vmatprep.subr.mxu0 0.0
    %1303 = vmatpush1.msra.mxu0 0.0
    %1304 = vmatprep.subr.mxu0 0.0
    %1305 = vmatpush1.msra.mxu0 0.0
    %1306 = vmatprep.subr.mxu0 0.0
    %1307 = vmatpush1.msra.mxu0 0.0
    %1308 = vmatprep.subr.mxu0 0.0
    %1309 = vmatpush1.msra.mxu0 0.0
    %1310 = vmatprep.subr.mxu0 0.0
    %1311 = vmatpush1.msra.mxu0 0.0
    %1312 = vmatprep.subr.mxu0 0.0
    %1313 = vmatpush1.msra.mxu0 0.0
    %1314 = vmatprep.subr.mxu0 0.0
    %1315 = vmatpush1.msra.mxu0 0.0
    %1316 = vmatprep.mubr.f32.mxu0 0.0
    %1317 = vmatmul.mubr.f32.gmra.mrb[0].mxu0 %v1112
    %v1318 = vpop.f32.mrb[0].mxu0
    %v1319 = vadd.f32 %v1224, %v1318
    %v1320 = vpop.f32.mrb[0].mxu0
    %1321 = vmatprep.mubr.f32.mxu0 0.0
    %1322 = vmatmul.mubr.f32.gmra.mrb[0].mxu0 %v1113
    %v1323 = vpop.f32.mrb[0].mxu0
    %v1324 = vadd.f32 %v1229, %v1323
    %v1325 = vpop.f32.mrb[0].mxu0
    %1326 = vmatprep.mubr.f32.mxu0 0.0
    %1327 = vmatmul.mubr.f32.gmra.mrb[0].mxu0 %v1114
    %v1328 = vpop.f32.mrb[0].mxu0
    %v1329 = vadd.f32 %v1234, %v1328
    %v1330 = vpop.f32.mrb[0].mxu0
    %1331 = vmatprep.mubr.f32.mxu0 0.0
    %1332 = vmatmul.mubr.f32.gmra.mrb[0].mxu0 %v1115
    %v1333 = vpop.f32.mrb[0].mxu0
    %v1334 = vadd.f32 %v1239, %v1333
    %v1335 = vpop.f32.mrb[0].mxu0
    %1336 = vmatprep.mubr.f32.mxu0 0.0
    %1337 = vmatmul.mubr.f32.gmra.mrb[0].mxu0 %v1116
    %v1338 = vpop.f32.mrb[0].mxu0
    %v1339 = vadd.f32 %v1244, %v1338
    %v1340 = vpop.f32.mrb[0].mxu0
    %1341 = vmatprep.mubr.f32.mxu0 0.0
    %1342 = vmatmul.mubr.f32.gmra.mrb[0].mxu0 %v1117
    %v1343 = vpop.f32.mrb[0].mxu0
    %v1344 = vadd.f32 %v1249, %v1343
    %v1345 = vpop.f32.mrb[0].mxu0
    %1346 = vdwg.mxu0
    %v1347 = vld [vmem:[#allocation3 + $0x8] sm:$0xff]
    %v1348 = vld [vmem:[#allocation3 + $0x10] sm:$0xff]
    %v1349 = vld [vmem:[#allocation3 + $0x18] sm:$0xff]
    %v1350 = vld [vmem:[#allocation3 + $0x20] sm:$0xff]
    %v1351 = vld [vmem:[#allocation3 + $0x28] sm:$0xff]
    %v1352 = vld [vmem:[#allocation3 + $0x30] sm:$0xff]
    %s1353 = scalar_lea.vmem [#allocation9], 256
    %v1354 = vld [vmem:[%s1353] sm:$0xff]
    %v1355 = vld [vmem:[%s1353 + $0x8] sm:$0xff]
    %v1356 = vld [vmem:[%s1353 + $0x10] sm:$0xff]
    %v1357 = vld [vmem:[%s1353 + $0x18] sm:$0xff]
    %v1358 = vld [vmem:[%s1353 + $0x20] sm:$0xff]
    %v1359 = vld [vmem:[%s1353 + $0x28] sm:$0xff]
    %v1360 = vld [vmem:[%s1353 + $0x30] sm:$0xff]
    %v1361 = vld [vmem:[%s1353 + $0x38] sm:$0xff]
    %v1362 = vld [vmem:[%s1353 + $0x40] sm:$0xff]
    %v1363 = vld [vmem:[%s1353 + $0x48] sm:$0xff]
    %v1364 = vld [vmem:[%s1353 + $0x50] sm:$0xff]
    %v1365 = vld [vmem:[%s1353 + $0x58] sm:$0xff]
    %v1366 = vld [vmem:[%s1353 + $0x60] sm:$0xff]
    %v1367 = vld [vmem:[%s1353 + $0x68] sm:$0xff]
    %v1368 = vld [vmem:[%s1353 + $0x70] sm:$0xff]
    %v1369 = vld [vmem:[%s1353 + $0x78] sm:$0xff]
    %1370 = vmatprep.subr.mxu0 0.0
    %1371 = vmatpush1.msra.mxu0 %v1354
    %1372 = vmatprep.subr.mxu0 0.0
    %1373 = vmatpush1.msra.mxu0 %v1355
    %1374 = vmatprep.subr.mxu0 0.0
    %1375 = vmatpush1.msra.mxu0 %v1356
    %1376 = vmatprep.subr.mxu0 0.0
    %1377 = vmatpush1.msra.mxu0 %v1357
    %1378 = vmatprep.subr.mxu0 0.0
    %1379 = vmatpush1.msra.mxu0 %v1358
    %1380 = vmatprep.subr.mxu0 0.0
    %1381 = vmatpush1.msra.mxu0 %v1359
    %1382 = vmatprep.subr.mxu0 0.0
    %1383 = vmatpush1.msra.mxu0 %v1360
    %1384 = vmatprep.subr.mxu0 0.0
    %1385 = vmatpush1.msra.mxu0 %v1361
    %1386 = vmatprep.subr.mxu0 0.0
    %1387 = vmatpush1.msra.mxu0 %v1362
    %1388 = vmatprep.subr.mxu0 0.0
    %1389 = vmatpush1.msra.mxu0 %v1363
    %1390 = vmatprep.subr.mxu0 0.0
    %1391 = vmatpush1.msra.mxu0 %v1364
    %1392 = vmatprep.subr.mxu0 0.0
    %1393 = vmatpush1.msra.mxu0 %v1365
    %1394 = vmatprep.subr.mxu0 0.0
    %1395 = vmatpush1.msra.mxu0 %v1366
    %1396 = vmatprep.subr.mxu0 0.0
    %1397 = vmatpush1.msra.mxu0 %v1367
    %1398 = vmatprep.subr.mxu0 0.0
    %1399 = vmatpush1.msra.mxu0 %v1368
    %1400 = vmatprep.subr.mxu0 0.0
    %1401 = vmatpush1.msra.mxu0 %v1369
    %1402 = vmatprep.subr.mxu0 0.0
    %1403 = vmatpush1.msra.mxu0 0.0
    %1404 = vmatprep.subr.mxu0 0.0
    %1405 = vmatpush1.msra.mxu0 0.0
    %1406 = vmatprep.subr.mxu0 0.0
    %1407 = vmatpush1.msra.mxu0 0.0
    %1408 = vmatprep.subr.mxu0 0.0
    %1409 = vmatpush1.msra.mxu0 0.0
    %1410 = vmatprep.subr.mxu0 0.0
    %1411 = vmatpush1.msra.mxu0 0.0
    %1412 = vmatprep.subr.mxu0 0.0
    %1413 = vmatpush1.msra.mxu0 0.0
    %1414 = vmatprep.subr.mxu0 0.0
    %1415 = vmatpush1.msra.mxu0 0.0
    %1416 = vmatprep.subr.mxu0 0.0
    %1417 = vmatpush1.msra.mxu0 0.0
    %1418 = vmatprep.subr.mxu0 0.0
    %1419 = vmatpush1.msra.mxu0 0.0
    %1420 = vmatprep.subr.mxu0 0.0
    %1421 = vmatpush1.msra.mxu0 0.0
    %1422 = vmatprep.subr.mxu0 0.0
    %1423 = vmatpush1.msra.mxu0 0.0
    %1424 = vmatprep.subr.mxu0 0.0
    %1425 = vmatpush1.msra.mxu0 0.0
    %1426 = vmatprep.subr.mxu0 0.0
    %1427 = vmatpush1.msra.mxu0 0.0
    %1428 = vmatprep.subr.mxu0 0.0
    %1429 = vmatpush1.msra.mxu0 0.0
    %1430 = vmatprep.subr.mxu0 0.0
    %1431 = vmatpush1.msra.mxu0 0.0
    %1432 = vmatprep.subr.mxu0 0.0
    %1433 = vmatpush1.msra.mxu0 0.0
    %1434 = vmatprep.mubr.f32.mxu0 0.0
    %1435 = vmatmul.mubr.f32.gmra.mrb[0].mxu0 %v1347
    %v1436 = vpop.f32.mrb[0].mxu0
    %v1437 = vadd.f32 0.0, %v1436
    %v1438 = vpop.f32.mrb[0].mxu0
    %1439 = vmatprep.mubr.f32.mxu0 0.0
    %1440 = vmatmul.mubr.f32.gmra.mrb[0].mxu0 %v1348
    %v1441 = vpop.f32.mrb[0].mxu0
    %v1442 = vadd.f32 0.0, %v1441
    %v1443 = vpop.f32.mrb[0].mxu0
    %1444 = vmatprep.mubr.f32.mxu0 0.0
    %1445 = vmatmul.mubr.f32.gmra.mrb[0].mxu0 %v1349
    %v1446 = vpop.f32.mrb[0].mxu0
    %v1447 = vadd.f32 0.0, %v1446
    %v1448 = vpop.f32.mrb[0].mxu0
    %1449 = vmatprep.mubr.f32.mxu0 0.0
    %1450 = vmatmul.mubr.f32.gmra.mrb[0].mxu0 %v1350
    %v1451 = vpop.f32.mrb[0].mxu0
    %v1452 = vadd.f32 0.0, %v1451
    %v1453 = vpop.f32.mrb[0].mxu0
    %1454 = vmatprep.mubr.f32.mxu0 0.0
    %1455 = vmatmul.mubr.f32.gmra.mrb[0].mxu0 %v1351
    %v1456 = vpop.f32.mrb[0].mxu0
    %v1457 = vadd.f32 0.0, %v1456
    %v1458 = vpop.f32.mrb[0].mxu0
    %1459 = vmatprep.mubr.f32.mxu0 0.0
    %1460 = vmatmul.mubr.f32.gmra.mrb[0].mxu0 %v1352
    %v1461 = vpop.f32.mrb[0].mxu0
    %v1462 = vadd.f32 0.0, %v1461
    %v1463 = vpop.f32.mrb[0].mxu0
    %1464 = vdwg.mxu0
    %v1465 = vadd.f32 %v1319, %v1437
    %v1466 = vadd.f32 %v1324, %v1442
    %v1467 = vadd.f32 %v1329, %v1447
    %v1468 = vadd.f32 %v1334, %v1452
    %v1469 = vadd.f32 %v1339, %v1457
    %v1470 = vadd.f32 %v1344, %v1462
    %v1471 = vld [vmem:[%s3 + $0x2] sm:$0x1]
    %v1472 = vld [vmem:[%s3 + $0x3] sm:$0x1]
    %v1473 = vmul.f32 %v1465, %v505
    %v1474 = vmul.f32 %v1466, %v506
    %v1475 = vmul.f32 %v1467, %v507
    %v1476 = vmul.f32 %v1468, %v508
    %v1477 = vmul.f32 %v1469, %v509
    %v1478 = vmul.f32 %v1470, %v510
    %v1479 = vadd.f32 %v1473, %v1474
    %v1480 = vadd.f32 %v1479, %v1475
    %v1481 = vadd.f32 %v1480, %v1476
    %v1482 = vadd.f32 %v1481, %v1477
    %v1483 = vadd.f32 %v1482, %v1478
    %v1484 = vrot.slane %v1483, 4
    %v1485 = vadd.f32 %v1483, %v1484
    %v1486 = vrot.slane %v1485, 2
    %v1487 = vadd.f32 %v1485, %v1486
    %v1488 = vrot.slane %v1487, 1
    %v1489 = vadd.f32 %v1487, %v1488
    %v1490 = vmul.f32 %v1473, %v1465
    %v1491 = vmul.f32 %v1474, %v1466
    %v1492 = vmul.f32 %v1475, %v1467
    %v1493 = vmul.f32 %v1476, %v1468
    %v1494 = vmul.f32 %v1477, %v1469
    %v1495 = vmul.f32 %v1478, %v1470
    %v1496 = vadd.f32 %v1490, %v1491
    %v1497 = vadd.f32 %v1496, %v1492
    %v1498 = vadd.f32 %v1497, %v1493
    %v1499 = vadd.f32 %v1498, %v1494
    %v1500 = vadd.f32 %v1499, %v1495
    %v1501 = vrot.slane %v1500, 4
    %v1502 = vadd.f32 %v1500, %v1501
    %v1503 = vrot.slane %v1502, 2
    %v1504 = vadd.f32 %v1502, %v1503
    %v1505 = vrot.slane %v1504, 1
    %v1506 = vadd.f32 %v1504, %v1505
    %v1507 = vsel %vm906, %v1489, %v1506
    %1508 = vmatprep.subr.mxu0 0.0
    %1509 = vmatpush1.msra.mxu0 %v352
    %1510 = vmatprep.subr.mxu0 0.0
    %1511 = vmatpush1.msra.mxu0 %v353
    %1512 = vmatprep.subr.mxu0 0.0
    %1513 = vmatpush1.msra.mxu0 %v354
    %1514 = vmatprep.subr.mxu0 0.0
    %1515 = vmatpush1.msra.mxu0 %v355
    %1516 = vmatprep.subr.mxu0 0.0
    %1517 = vmatpush1.msra.mxu0 %v356
    %1518 = vmatprep.subr.mxu0 0.0
    %1519 = vmatpush1.msra.mxu0 %v357
    %1520 = vmatprep.subr.mxu0 0.0
    %1521 = vmatpush1.msra.mxu0 %v358
    %1522 = vmatprep.subr.mxu0 0.0
    %1523 = vmatpush1.msra.mxu0 %v359
    %1524 = vmatprep.subr.mxu0 0.0
    %1525 = vmatpush1.msra.mxu0 %v360
    %1526 = vmatprep.subr.mxu0 0.0
    %1527 = vmatpush1.msra.mxu0 %v361
    %1528 = vmatprep.subr.mxu0 0.0
    %1529 = vmatpush1.msra.mxu0 %v362
    %1530 = vmatprep.subr.mxu0 0.0
    %1531 = vmatpush1.msra.mxu0 %v363
    %1532 = vmatprep.subr.mxu0 0.0
    %1533 = vmatpush1.msra.mxu0 %v364
    %1534 = vmatprep.subr.mxu0 0.0
    %1535 = vmatpush1.msra.mxu0 %v365
    %1536 = vmatprep.subr.mxu0 0.0
    %1537 = vmatpush1.msra.mxu0 %v366
    %1538 = vmatprep.subr.mxu0 0.0
    %1539 = vmatpush1.msra.mxu0 %v367
    %1540 = vmatprep.subr.mxu0 0.0
    %1541 = vmatpush1.msra.mxu0 0.0
    %1542 = vmatprep.subr.mxu0 0.0
    %1543 = vmatpush1.msra.mxu0 0.0
    %1544 = vmatprep.subr.mxu0 0.0
    %1545 = vmatpush1.msra.mxu0 0.0
    %1546 = vmatprep.subr.mxu0 0.0
    %1547 = vmatpush1.msra.mxu0 0.0
    %1548 = vmatprep.subr.mxu0 0.0
    %1549 = vmatpush1.msra.mxu0 0.0
    %1550 = vmatprep.subr.mxu0 0.0
    %1551 = vmatpush1.msra.mxu0 0.0
    %1552 = vmatprep.subr.mxu0 0.0
    %1553 = vmatpush1.msra.mxu0 0.0
    %1554 = vmatprep.subr.mxu0 0.0
    %1555 = vmatpush1.msra.mxu0 0.0
    %1556 = vmatprep.subr.mxu0 0.0
    %1557 = vmatpush1.msra.mxu0 0.0
    %1558 = vmatprep.subr.mxu0 0.0
    %1559 = vmatpush1.msra.mxu0 0.0
    %1560 = vmatprep.subr.mxu0 0.0
    %1561 = vmatpush1.msra.mxu0 0.0
    %1562 = vmatprep.subr.mxu0 0.0
    %1563 = vmatpush1.msra.mxu0 0.0
    %1564 = vmatprep.subr.mxu0 0.0
    %1565 = vmatpush1.msra.mxu0 0.0
    %1566 = vmatprep.subr.mxu0 0.0
    %1567 = vmatpush1.msra.mxu0 0.0
    %1568 = vmatprep.subr.mxu0 0.0
    %1569 = vmatpush1.msra.mxu0 0.0
    %1570 = vmatprep.subr.mxu0 0.0
    %1571 = vmatpush1.msra.mxu0 0.0
    %1572 = vmatprep.mubr.f32.mxu0 0.0
    %1573 = vmatmul.mubr.f32.gmra.mrb[0].mxu0 %v1507
    %v1574 = vpop.f32.mrb[0].mxu0
    %v1575 = vadd.f32 0.0, %v1574
    %v1576 = vpop.f32.mrb[0].mxu0
    %1577 = vdwg.mxu0
    %v1578 = vmul.f32 %v1575, 0.001953125
    %v1579 = vmul.f32 %v1578, %v1578
    %v1581 = vrot.slane %v1579, 7
    %v1583 = vsub.f32 %v1578, %v1581
    %v1584 = vadd.f32 %v1583, 1e-05
    %v1585 = vrsqrt.pop %v1584
    %v1587 = vrot.slane %v1585, 1
    %v1589 = vmul.f32 %v1471, %v1587
    %v1590 = vmul.f32 %v1578, %v1589
    %v1591 = vsub.f32 %v1472, %v1590
    %v1593 = vrot.slane %v1591, 7
    %v1595 = vsel %vm906, %v1589, %v1593
    %v1597 = vsel %vm996, %v1595, 0
    %1599 = vmatprep.subr.mxu0 0.0
    %1600 = vmatpush1.msra.mxu0 %v1002
    %1601 = vmatprep.subr.mxu0 0.0
    %1602 = vmatpush1.msra.mxu0 0.0
    %1603 = vmatprep.subr.mxu0 0.0
    %1604 = vmatpush1.msra.mxu0 0.0
    %1605 = vmatprep.subr.mxu0 0.0
    %1606 = vmatpush1.msra.mxu0 0.0
    %1607 = vmatprep.subr.mxu0 0.0
    %1608 = vmatpush1.msra.mxu0 0.0
    %1609 = vmatprep.subr.mxu0 0.0
    %1610 = vmatpush1.msra.mxu0 0.0
    %1611 = vmatprep.subr.mxu0 0.0
    %1612 = vmatpush1.msra.mxu0 0.0
    %1613 = vmatprep.subr.mxu0 0.0
    %1614 = vmatpush1.msra.mxu0 0.0
    %1615 = vmatprep.subr.mxu0 0.0
    %1616 = vmatpush1.msra.mxu0 0.0
    %1617 = vmatprep.subr.mxu0 0.0
    %1618 = vmatpush1.msra.mxu0 0.0
    %1619 = vmatprep.subr.mxu0 0.0
    %1620 = vmatpush1.msra.mxu0 0.0
    %1621 = vmatprep.subr.mxu0 0.0
    %1622 = vmatpush1.msra.mxu0 0.0
    %1623 = vmatprep.subr.mxu0 0.0
    %1624 = vmatpush1.msra.mxu0 0.0
    %1625 = vmatprep.subr.mxu0 0.0
    %1626 = vmatpush1.msra.mxu0 0.0
    %1627 = vmatprep.subr.mxu0 0.0
    %1628 = vmatpush1.msra.mxu0 0.0
    %1629 = vmatprep.subr.mxu0 0.0
    %1630 = vmatpush1.msra.mxu0 0.0
    %1631 = vmatprep.subr.mxu0 0.0
    %1632 = vmatpush1.msra.mxu0 0.0
    %1633 = vmatprep.subr.mxu0 0.0
    %1634 = vmatpush1.msra.mxu0 0.0
    %1635 = vmatprep.subr.mxu0 0.0
    %1636 = vmatpush1.msra.mxu0 0.0
    %1637 = vmatprep.subr.mxu0 0.0
    %1638 = vmatpush1.msra.mxu0 0.0
    %1639 = vmatprep.subr.mxu0 0.0
    %1640 = vmatpush1.msra.mxu0 0.0
    %1641 = vmatprep.subr.mxu0 0.0
    %1642 = vmatpush1.msra.mxu0 0.0
    %1643 = vmatprep.subr.mxu0 0.0
    %1644 = vmatpush1.msra.mxu0 0.0
    %1645 = vmatprep.subr.mxu0 0.0
    %1646 = vmatpush1.msra.mxu0 0.0
    %1647 = vmatprep.subr.mxu0 0.0
    %1648 = vmatpush1.msra.mxu0 0.0
    %1649 = vmatprep.subr.mxu0 0.0
    %1650 = vmatpush1.msra.mxu0 0.0
    %1651 = vmatprep.subr.mxu0 0.0
    %1652 = vmatpush1.msra.mxu0 0.0
    %1653 = vmatprep.subr.mxu0 0.0
    %1654 = vmatpush1.msra.mxu0 0.0
    %1655 = vmatprep.subr.mxu0 0.0
    %1656 = vmatpush1.msra.mxu0 0.0
    %1657 = vmatprep.subr.mxu0 0.0
    %1658 = vmatpush1.msra.mxu0 0.0
    %1659 = vmatprep.subr.mxu0 0.0
    %1660 = vmatpush1.msra.mxu0 0.0
    %1661 = vmatprep.subr.mxu0 0.0
    %1662 = vmatpush1.msra.mxu0 0.0
    %1663 = vmatprep.mubr.f32.mxu0 0.0
    %1664 = vmatmul.mubr.f32.gmra.mrb[0].mxu0 %v1597
    %v1665 = vpop.f32.mrb[0].mxu0
    %v1666 = vadd.f32 0.0, %v1665
    %v1667 = vpop.f32.mrb[0].mxu0
    %1668 = vdwg.mxu0
    %v1669 = vlaneseq
    %v1670 = vshrl.u32 %v1669, 7
    %v1671 = vsub.s32 0, %v1670
    %v1672 = vrot.slane %v1666, %v1671
    %v1673 = vmul.f32 %v1465, %v1672
    %v1674 = vmul.f32 %v1466, %v1672
    %v1675 = vmul.f32 %v1467, %v1672
    %v1676 = vmul.f32 %v1468, %v1672
    %v1677 = vmul.f32 %v1469, %v1672
    %v1678 = vmul.f32 %v1470, %v1672
    %v1679 = vlaneseq
    %v1680 = vshrl.u32 %v1679, 7
    %v1681 = vsub.s32 1, %v1680
    %v1682 = vrot.slane %v1666, %v1681
    %v1683 = vadd.f32 %v1673, %v1682
    %v1684 = vadd.f32 %v1674, %v1682
    %v1685 = vadd.f32 %v1675, %v1682
    %v1686 = vadd.f32 %v1676, %v1682
    %v1687 = vadd.f32 %v1677, %v1682
    %v1688 = vadd.f32 %v1678, %v1682
    %v1689 = vmax.f32 %v1683, 0.0
    %v1690 = vmax.f32 %v1684, 0.0
    %v1691 = vmax.f32 %v1685, 0.0
    %v1692 = vmax.f32 %v1686, 0.0
    %v1693 = vmax.f32 %v1687, 0.0
    %v1694 = vmax.f32 %v1688, 0.0
    %v1695 = vld [vmem:[#allocation2 + $0x7] sm:$0xff]
    %v1696 = vld [vmem:[#allocation2 + $0xf] sm:$0xff]
    %v1697 = vld [vmem:[#allocation2 + $0x17] sm:$0xff]
    %v1698 = vld [vmem:[#allocation2 + $0x1f] sm:$0xff]
    %v1699 = vld [vmem:[#allocation2 + $0x27] sm:$0xff]
    %v1700 = vld [vmem:[#allocation2 + $0x2f] sm:$0xff]
    %v1701 = vadd.f32 %v1695, %v1689
    %v1702 = vadd.f32 %v1696, %v1690
    %v1703 = vadd.f32 %v1697, %v1691
    %v1704 = vadd.f32 %v1698, %v1692
    %v1705 = vadd.f32 %v1699, %v1693
    %v1706 = vadd.f32 %v1700, %v1694
    %v1707 = vmax.f32 %v1701, 0.0
    %v1708 = vmax.f32 %v1702, 0.0
    %v1709 = vmax.f32 %v1703, 0.0
    %v1710 = vmax.f32 %v1704, 0.0
    %v1711 = vmax.f32 %v1705, 0.0
    %v1712 = vmax.f32 %v1706, 0.0
    %1713 = vst [vmem:[#allocation10] sm:$0xff] %v1707
    %1714 = vst [vmem:[#allocation10 + $0x8] sm:$0xff] %v1708
    %1715 = vst [vmem:[#allocation10 + $0x10] sm:$0xff] %v1709
    %1716 = vst [vmem:[#allocation10 + $0x18] sm:$0xff] %v1710
    %1717 = vst [vmem:[#allocation10 + $0x20] sm:$0xff] %v1711
    %1718 = vst [vmem:[#allocation10 + $0x28] sm:$0xff] %v1712
    // Predicated region
    $region30: #{tpu_custom_call.1} parent=1 // pred_check
      _
    $region31: #{tpu_custom_call.1} parent=1 // pred_check_branch
      %1720 = sbr.rel (0) target = $region33
    $region32: #{tpu_custom_call.1} parent=1 // pred_region
      %s1722 = ssub.s32 768, 768
      %1723 = vsyncadd [#allocation6], %s1722
      %s1724 = sshll.u32 [#allocation10], 4
      %s1725 = int_to_ptr.vmem [resolvable:$true] %s1724
      %1730 = dma.vmem_to_hbm [thread:$0]  %s1725, 768, %s4, [#allocation6], 128, 128, 8
    $region33: #{tpu_custom_call.1} parent=1 // pred_fallthru
      _
    // Predicated region
    $region34: #{tpu_custom_call.1} parent=1 // pred_check
      _
    $region35: #{tpu_custom_call.1} parent=1 // pred_check_branch
      %1732 = sbr.rel (0) target = $region37
    $region36: #{tpu_custom_call.1} parent=1 // pred_region
      %1733 = dma.done [#allocation6], 768
    $region37: #{tpu_custom_call.1} parent=1 // pred_fallthru
      _
    %1734 = vsyncpa [#allocation5], 1
    %1735 = vsyncpa [#allocation8], 1
    %1736 = vsyncpa [#allocation6], 1

</llo_original>
